<compile_context>
chip_gen: v7x
topology: tpu7x:2x2x1
jax: 0.10.0
libtpu: 0.0.40
codegen_flags: <defaults>
</compile_context>

<pallas_src>
import functools

import jax
import jax.numpy as jnp
from jax.experimental import pallas as pl
from jax.experimental.pallas import tpu as pltpu


# ----------------------------------------------------------------------------
# Pallas kernel: one ResidualAttentionBlock step of the fused layer loop.
# Grid: (batch-tile bi, layer l). The activation is carried across l in acc_ref.
# ----------------------------------------------------------------------------
def fused_resblock_kernel(
    x_ref,        # (Bt, S, D)  input activations (same block across l -> fetched once per bi)
    ln1_w_ref,    # (1, 1, D)   f32
    ln1_b_ref,    # (1, 1, D)   f32
    wqkv_t_ref,   # (1, D, 3D)  bf16  (in_proj_weight pre-transposed, Q cols pre-scaled)
    bqkv_ref,     # (1, 1, 3D)  f32   (Q segment pre-scaled)
    wo_t_ref,     # (1, D, D)   bf16  (out_proj.weight pre-transposed)
    bo_ref,       # (1, 1, D)   f32
    ln2_w_ref,    # (1, 1, D)   f32
    ln2_b_ref,    # (1, 1, D)   f32
    wfc_t_ref,    # (1, D, 4D)  bf16  (c_fc.weight pre-transposed)
    bfc_ref,      # (1, 1, 4D)  f32
    wproj_t_ref,  # (1, 4D, D)  bf16  (c_proj.weight pre-transposed)
    bproj_ref,    # (1, 1, D)   f32
    o_ref,        # (Bt, S, D)  output (same block across l -> resident; written at last l)
    acc_ref,      # (Bt, S, D)  f32 VMEM scratch: residual stream carried across layers
    *,
    n_head: int,
):
    l = pl.program_id(1)
    n_layers = pl.num_programs(1)

    @pl.when(l == 0)
    def _():
        acc_ref[...] = x_ref[...].astype(jnp.float32)

    xb = acc_ref[...]                      # (Bt, S, D) f32 residual stream
    Bt, S, D = xb.shape
    dh = D // n_head
    x = xb.reshape(Bt * S, D)              # fold batch into rows for shared-weight matmuls

    def layernorm(v, w, b):                # TokenLayerNorm: fp32 math
        mu = jnp.mean(v, axis=-1, keepdims=True)
        var = jnp.mean((v - mu) ** 2, axis=-1, keepdims=True)
        return (v - mu) * jax.lax.rsqrt(var + 1e-5) * w + b

    # ---- attention branch ---------------------------------------------------
    h = layernorm(x, ln1_w_ref[0], ln1_b_ref[0]).astype(jnp.bfloat16)
    qkv = jnp.dot(h, wqkv_t_ref[0], preferred_element_type=jnp.float32)
    qkv = qkv + bqkv_ref[0]                # (Bt*S, 3D) f32; Q already scaled by 1/sqrt(dh)
    q = qkv[:, 0 * D:1 * D].reshape(Bt, S, D).astype(jnp.bfloat16)
    k = qkv[:, 1 * D:2 * D].reshape(Bt, S, D).astype(jnp.bfloat16)
    v = qkv[:, 2 * D:3 * D].reshape(Bt, S, D).astype(jnp.bfloat16)

    wo_t = wo_t_ref[0]                     # (D, D) bf16
    attn = jnp.zeros((Bt * S, D), jnp.float32)
    # TODO(synk): attn_mask (additive) support omitted; module default is None.
    # TODO(synk): for very large n_head, switch to lax.fori_loop over a qkv VMEM
    #             scratch (pl.ds + pl.multiple_of) to bound live ranges / code size.
    for hd in range(n_head):
        sl = slice(hd * dh, (hd + 1) * dh)
        # q·kᵀ without an explicit transpose: contract last dims of both operands.
        s = jax.lax.dot_general(
            q[:, :, sl], k[:, :, sl],
            dimension_numbers=(((2,), (2,)), ((0,), (0,))),
            preferred_element_type=jnp.float32)                      # (Bt, S, S)
        s = s - jnp.max(s, axis=-1, keepdims=True)
        p = jnp.exp(s)
        p = p * pl.reciprocal(jnp.sum(p, axis=-1, keepdims=True), approx=True)
        ctx = jax.lax.dot_general(
            p.astype(jnp.bfloat16), v[:, :, sl],
            dimension_numbers=(((2,), (1,)), ((0,), (0,))),
            preferred_element_type=jnp.float32)                      # (Bt, S, dh)
        # Fused output projection: accumulate directly into the full-D attention out.
        attn = attn + jnp.dot(ctx.reshape(Bt * S, dh).astype(jnp.bfloat16),
                              wo_t[sl, :], preferred_element_type=jnp.float32)
    x = x + attn + bo_ref[0]

    # ---- MLP branch ---------------------------------------------------------
    h2 = layernorm(x, ln2_w_ref[0], ln2_b_ref[0]).astype(jnp.bfloat16)
    fc = jnp.dot(h2, wfc_t_ref[0], preferred_element_type=jnp.float32)
    fc = fc + bfc_ref[0]
    # TODO(synk): on v6e/v7x the bias-add + QuickGELU could run in bf16 to halve the
    #             (S,4D) footprint; kept f32 here for gen-agnostic numerics.
    fc = fc * jax.nn.sigmoid(1.702 * fc)                             # QuickGELU (f32)
    mlp = jnp.dot(fc.astype(jnp.bfloat16), wproj_t_ref[0],
                  preferred_element_type=jnp.float32)
    x = x + mlp + bproj_ref[0]

    @pl.when(l < n_layers - 1)
    def _():
        acc_ref[...] = x.reshape(Bt, S, D)

    @pl.when(l == n_layers - 1)
    def _():
        o_ref[...] = x.reshape(Bt, S, D).astype(o_ref.dtype)


# ----------------------------------------------------------------------------
# Parameter prep: done ONCE — stack per-layer weights, pre-transpose, pre-cast,
# and fold the 1/sqrt(dh) query scale into the QKV projection.
# ----------------------------------------------------------------------------
def prepare_params(layer_params, n_head):
    f32, bf16 = jnp.float32, jnp.bfloat16
    L = len(layer_params)
    D = layer_params[0]["ln1_w"].shape[0]
    dh = D // n_head
    scale = 1.0 / (dh ** 0.5)

    def vec(key):
        a = jnp.stack([p[key] for p in layer_params]).astype(f32)    # (L, dim)
        return a.reshape(L, 1, a.shape[-1])                          # (L, 1, dim)

    def mat_t(key):
        return jnp.stack([p[key].T for p in layer_params]).astype(f32)  # (L, in, out)

    # Fold query scaling into the Q columns / Q bias segment (zero in-kernel cost).
    col_scale = jnp.concatenate(
        [jnp.full((D,), scale, f32), jnp.ones((2 * D,), f32)])
    wqkv_t = mat_t("in_proj_weight") * col_scale[None, None, :]
    bqkv = vec("in_proj_bias") * col_scale[None, None, :]

    return {
        "ln1_w": vec("ln1_w"), "ln1_b": vec("ln1_b"),
        "wqkv_t": wqkv_t.astype(bf16), "bqkv": bqkv,
        "wo_t": mat_t("out_proj_weight").astype(bf16), "bo": vec("out_proj_bias"),
        "ln2_w": vec("ln2_w"), "ln2_b": vec("ln2_b"),
        "wfc_t": mat_t("c_fc_weight").astype(bf16), "bfc": vec("c_fc_bias"),
        "wproj_t": mat_t("c_proj_weight").astype(bf16), "bproj": vec("c_proj_bias"),
    }


# ----------------------------------------------------------------------------
# Generation-aware VMEM budget (counts intermediates; caps at usable capacity).
# ----------------------------------------------------------------------------
def _vmem_limit_bytes(Bt, S, D):
    # Double-buffered bf16 weight matrices (QKV + out + fc + proj) = 48*D^2 bytes.
    w = 2 * 2 * (3 * D * D + D * D + 4 * D * D + 4 * D * D)
    # Double-buffered f32 vectors.
    vecs = 2 * 4 * (2 * D + 3 * D + D + 2 * D + 4 * D + D)
    # Input + output activation blocks (double-buffered) + residual scratch (f32).
    acts = (2 + 2 + 1) * Bt * S * D * 4
    # Live f32 intermediates: qkv(3D) + fc(4D) + attn acc(D) + per-head (S,S) x2,
    # plus bf16 h/q/k/v copies.
    inter = Bt * S * (3 * D + 4 * D + D) * 4 + 4 * Bt * S * D * 2 + 2 * Bt * S * S * 4
    need = int(1.25 * (w + vecs + acts + inter)) + (4 << 20)
    try:
        cap = pltpu.get_tpu_info().vmem_capacity_bytes
    except Exception:  # pragma: no cover - conservative fallback
        cap = 128 << 20
    usable = int(cap * 0.8)          # ~51 MiB on v7x (64 MiB), ~102 MiB on v5e/v6e (128 MiB)
    return int(min(max(need, 32 << 20), usable))


def _pick_batch_tile(B, max_bt=8):
    for bt in range(min(B, max_bt), 0, -1):
        if B % bt == 0:
            return bt
    return 1


# ----------------------------------------------------------------------------
# Wrapper: the whole MetricTransformer (all layers) in one pallas_call.
# ----------------------------------------------------------------------------
def metric_transformer(x, params, n_head, max_batch_tile=8):
    B, S, D = x.shape
    order = ["ln1_w", "ln1_b", "wqkv_t", "bqkv", "wo_t", "bo",
             "ln2_w", "ln2_b", "wfc_t", "bfc", "wproj_t", "bproj"]
    args = [params[k] for k in order]
    L = params["ln1_w"].shape[0]
    Bt = _pick_batch_tile(B, max_batch_tile)

    # TODO(synk): for D >= 1024 on v7x (64 MiB VMEM) chunk wfc_t/wproj_t along the 4D
    #             hidden axis so only a slice of the MLP weights is resident per step.
    def wspec(shape):
        nd = len(shape)
        return pl.BlockSpec((1,) + tuple(shape[1:]),
                            lambda bi, l, _nd=nd: (l,) + (0,) * (_nd - 1))

    in_specs = [pl.BlockSpec((Bt, S, D), lambda bi, l: (bi, 0, 0))]
    in_specs += [wspec(a.shape) for a in args]
    out_specs = pl.BlockSpec((Bt, S, D), lambda bi, l: (bi, 0, 0))

    kernel = functools.partial(fused_resblock_kernel, n_head=n_head)
    return pl.pallas_call(
        kernel,
        out_shape=jax.ShapeDtypeStruct((B, S, D), x.dtype),
        grid=(B // Bt, L),
        in_specs=in_specs,
        out_specs=out_specs,
        scratch_shapes=[pltpu.VMEM((Bt, S, D), jnp.float32)],
        compiler_params=pltpu.CompilerParams(
            dimension_semantics=("parallel", "arbitrary"),
            vmem_limit_bytes=_vmem_limit_bytes(Bt, S, D)),
    )(x, *args)


# ----------------------------------------------------------------------------
# Pure-JAX f32 reference (mirrors the PyTorch forward) for a sanity check.
# ----------------------------------------------------------------------------
def _ref_block(x, p, n_head):
    B, S, D = x.shape
    dh = D // n_head

    def ln(v, w, b):
        vf = v.astype(jnp.float32)
        mu = vf.mean(-1, keepdims=True)
        var = ((vf - mu) ** 2).mean(-1, keepdims=True)
        return ((vf - mu) / jnp.sqrt(var + 1e-5)) * w + b

    h = ln(x, p["ln1_w"], p["ln1_b"])
    qkv = h @ p["in_proj_weight"].T + p["in_proj_bias"]
    q, k, v = jnp.split(qkv, 3, axis=-1)
    q = q.reshape(B, S, n_head, dh).transpose(0, 2, 1, 3) / jnp.sqrt(dh)
    k = k.reshape(B, S, n_head, dh).transpose(0, 2, 1, 3)
    v = v.reshape(B, S, n_head, dh).transpose(0, 2, 1, 3)
    att = jax.nn.softmax(q @ k.transpose(0, 1, 3, 2), axis=-1)
    ctx = (att @ v).transpose(0, 2, 1, 3).reshape(B, S, D)
    attn_out = ctx @ p["out_proj_weight"].T + p["out_proj_bias"]
    x = x + attn_out

    h2 = ln(x, p["ln2_w"], p["ln2_b"])
    fc = h2 @ p["c_fc_weight"].T + p["c_fc_bias"]
    fc = fc * jax.nn.sigmoid(1.702 * fc)
    mlp = fc @ p["c_proj_weight"].T + p["c_proj_bias"]
    return x + mlp


def _ref_forward(x, layer_params, n_head):
    for p in layer_params:
        x = _ref_block(x, p, n_head)
    return x


# ----------------------------------------------------------------------------
# Deterministic parameter construction (PyTorch-convention shapes).
# ----------------------------------------------------------------------------
def make_params(key, width, layers):
    D = width
    layer_params = []
    for _ in range(layers):
        ks = jax.random.split(key, 5)
        key = ks[0]
        layer_params.append({
            "ln1_w": jnp.ones((D,), jnp.float32),
            "ln1_b": jnp.zeros((D,), jnp.float32),
            "in_proj_weight": 0.05 * jax.random.normal(ks[1], (3 * D, D), jnp.float32),
            "in_proj_bias": jnp.zeros((3 * D,), jnp.float32),
            "out_proj_weight": 0.05 * jax.random.normal(ks[2], (D, D), jnp.float32),
            "out_proj_bias": jnp.zeros((D,), jnp.float32),
            "ln2_w": jnp.ones((D,), jnp.float32),
            "ln2_b": jnp.zeros((D,), jnp.float32),
            "c_fc_weight": 0.05 * jax.random.normal(ks[3], (4 * D, D), jnp.float32),
            "c_fc_bias": jnp.zeros((4 * D,), jnp.float32),
            "c_proj_weight": 0.05 * jax.random.normal(ks[4], (D, 4 * D), jnp.float32),
            "c_proj_bias": jnp.zeros((D,), jnp.float32),
        })
    return layer_params


if __name__ == "__main__":
    batch, seq, width, heads, layers = 2, 8, 32, 4, 2

    key = jax.random.PRNGKey(0)
    kx, kp = jax.random.split(key)
    x = jax.random.normal(kx, (batch, seq, width), jnp.float32)
    raw_params = make_params(kp, width, layers)
    packed = prepare_params(raw_params, heads)

    out = metric_transformer(x, packed, heads)
    out = jax.block_until_ready(out)

    ref = _ref_forward(x, raw_params, heads)
    assert out.shape == (batch, seq, width)
    # bf16 MXU operands + approx reciprocal -> compare against f32 ref loosely.
    assert jnp.allclose(out, ref, atol=2e-2, rtol=2e-2), (
        float(jnp.max(jnp.abs(out - ref)))
    )
    print("KERNEL_OK")
</pallas_src>

<mosaic_0001>
module attributes {stable_mosaic.version = 11 : i64} {
  func.func @fused_resblock_kernel(%arg0: i32, %arg1: i32, %arg2: memref<2x8x32xf32, #tpu.memory_space<vmem>>, %arg3: memref<1x1x32xf32, #tpu.memory_space<vmem>>, %arg4: memref<1x1x32xf32, #tpu.memory_space<vmem>>, %arg5: memref<1x32x96xbf16, #tpu.memory_space<vmem>>, %arg6: memref<1x1x96xf32, #tpu.memory_space<vmem>>, %arg7: memref<1x32x32xbf16, #tpu.memory_space<vmem>>, %arg8: memref<1x1x32xf32, #tpu.memory_space<vmem>>, %arg9: memref<1x1x32xf32, #tpu.memory_space<vmem>>, %arg10: memref<1x1x32xf32, #tpu.memory_space<vmem>>, %arg11: memref<1x32x128xbf16, #tpu.memory_space<vmem>>, %arg12: memref<1x1x128xf32, #tpu.memory_space<vmem>>, %arg13: memref<1x128x32xbf16, #tpu.memory_space<vmem>>, %arg14: memref<1x1x32xf32, #tpu.memory_space<vmem>>, %arg15: memref<2x8x32xf32, #tpu.memory_space<vmem>>, %arg16: memref<2x8x32xf32, #tpu.memory_space<vmem>>) attributes {dimension_semantics = [#tpu.dimension_semantics<parallel>, #tpu.dimension_semantics<arbitrary>], iteration_bounds = array<i64: 1, 2>, scalar_prefetch = 0 : i64, scratch_operands = 1 : i64, tpu.core_type = #tpu.core_type<tc>, window_params = [{transform_indices = @transform_0, window_bounds = array<i64: 2, 8, 32>}, {transform_indices = @transform_1, window_bounds = array<i64: 1, 1, 32>}, {transform_indices = @transform_2, window_bounds = array<i64: 1, 1, 32>}, {transform_indices = @transform_3, window_bounds = array<i64: 1, 32, 96>}, {transform_indices = @transform_4, window_bounds = array<i64: 1, 1, 96>}, {transform_indices = @transform_5, window_bounds = array<i64: 1, 32, 32>}, {transform_indices = @transform_6, window_bounds = array<i64: 1, 1, 32>}, {transform_indices = @transform_7, window_bounds = array<i64: 1, 1, 32>}, {transform_indices = @transform_8, window_bounds = array<i64: 1, 1, 32>}, {transform_indices = @transform_9, window_bounds = array<i64: 1, 32, 128>}, {transform_indices = @transform_10, window_bounds = array<i64: 1, 1, 128>}, {transform_indices = @transform_11, window_bounds = array<i64: 1, 128, 32>}, {transform_indices = @transform_12, window_bounds = array<i64: 1, 1, 32>}, {transform_indices = @transform_13, window_bounds = array<i64: 2, 8, 32>}]} {
    %c0_i32 = arith.constant 0 : i32
    %0 = arith.cmpi eq, %arg1, %c0_i32 : i32
    %1 = arith.extui %0 : i1 to i32
    %c0_i32_0 = arith.constant 0 : i32
    %2 = arith.cmpi ne, %1, %c0_i32_0 : i32
    scf.if %2 {
      %c0_77 = arith.constant 0 : index
      %c0_78 = arith.constant 0 : index
      %c0_79 = arith.constant 0 : index
      %197 = vector.load %arg2[%c0_77, %c0_78, %c0_79] : memref<2x8x32xf32, #tpu.memory_space<vmem>>, vector<2x8x32xf32>
      %c0_80 = arith.constant 0 : index
      %c0_81 = arith.constant 0 : index
      %c0_82 = arith.constant 0 : index
      %198 = vector.load %arg16[%c0_80, %c0_81, %c0_82] : memref<2x8x32xf32, #tpu.memory_space<vmem>>, vector<2x8x32xf32>
      tpu.vector_store %arg16[%c0_80, %c0_81, %c0_82], %197 {strides = array<i32>} : memref<2x8x32xf32, #tpu.memory_space<vmem>>, vector<2x8x32xf32>,
    } else {
    }
    %c0 = arith.constant 0 : index
    %c0_1 = arith.constant 0 : index
    %c0_2 = arith.constant 0 : index
    %3 = vector.load %arg16[%c0, %c0_1, %c0_2] : memref<2x8x32xf32, #tpu.memory_space<vmem>>, vector<2x8x32xf32>
    %4 = vector.shape_cast %3 : vector<2x8x32xf32> to vector<16x32xf32>
    %c0_3 = arith.constant 0 : index
    %c0_4 = arith.constant 0 : index
    %c0_5 = arith.constant 0 : index
    %5 = vector.load %arg3[%c0_3, %c0_4, %c0_5] : memref<1x1x32xf32, #tpu.memory_space<vmem>>, vector<1x1x32xf32>
    %6 = vector.shape_cast %5 : vector<1x1x32xf32> to vector<1x32xf32>
    %c0_6 = arith.constant 0 : index
    %c0_7 = arith.constant 0 : index
    %c0_8 = arith.constant 0 : index
    %7 = vector.load %arg4[%c0_6, %c0_7, %c0_8] : memref<1x1x32xf32, #tpu.memory_space<vmem>>, vector<1x1x32xf32>
    %8 = vector.shape_cast %7 : vector<1x1x32xf32> to vector<1x32xf32>
    %cst = arith.constant dense<0.000000e+00> : vector<16xf32>
    %9 = vector.multi_reduction <add>, %4, %cst [1] : vector<16x32xf32> to vector<16xf32>
    %10 = vector.shape_cast %9 : vector<16xf32> to vector<16x1xf32>
    %cst_9 = arith.constant 3.200000e+01 : f32
    %11 = vector.broadcast %cst_9 : f32 to vector<16x1xf32>
    %12 = arith.divf %10, %11 : vector<16x1xf32>
    %13 = vector.broadcast %12 : vector<16x1xf32> to vector<16x32xf32>
    %14 = arith.subf %4, %13 : vector<16x32xf32>
    %15 = arith.mulf %14, %14 : vector<16x32xf32>
    %cst_10 = arith.constant dense<0.000000e+00> : vector<16xf32>
    %16 = vector.multi_reduction <add>, %15, %cst_10 [1] : vector<16x32xf32> to vector<16xf32>
    %17 = vector.shape_cast %16 : vector<16xf32> to vector<16x1xf32>
    %cst_11 = arith.constant 3.200000e+01 : f32
    %18 = vector.broadcast %cst_11 : f32 to vector<16x1xf32>
    %19 = arith.divf %17, %18 : vector<16x1xf32>
    %20 = vector.broadcast %12 : vector<16x1xf32> to vector<16x32xf32>
    %21 = arith.subf %4, %20 : vector<16x32xf32>
    %cst_12 = arith.constant 9.99999974E-6 : f32
    %22 = vector.broadcast %cst_12 : f32 to vector<16x1xf32>
    %23 = arith.addf %19, %22 : vector<16x1xf32>
    %24 = math.rsqrt %23 : vector<16x1xf32>
    %25 = vector.broadcast %24 : vector<16x1xf32> to vector<16x32xf32>
    %26 = arith.mulf %21, %25 : vector<16x32xf32>
    %27 = vector.broadcast %6 : vector<1x32xf32> to vector<16x32xf32>
    %28 = arith.mulf %26, %27 : vector<16x32xf32>
    %29 = vector.broadcast %8 : vector<1x32xf32> to vector<16x32xf32>
    %30 = arith.addf %28, %29 : vector<16x32xf32>
    %31 = arith.truncf %30 : vector<16x32xf32> to vector<16x32xbf16>
    %c0_13 = arith.constant 0 : index
    %c0_14 = arith.constant 0 : index
    %c0_15 = arith.constant 0 : index
    %32 = vector.load %arg5[%c0_13, %c0_14, %c0_15] : memref<1x32x96xbf16, #tpu.memory_space<vmem>>, vector<1x32x96xbf16>
    %33 = vector.shape_cast %32 : vector<1x32x96xbf16> to vector<32x96xbf16>
    %cst_16 = arith.constant dense<0.000000e+00> : vector<16x96xf32>
    %34 = tpu.matmul %31, %33, %cst_16 {dimension_numbers = #tpu.dot_dimension_numbers<[1], [0], [0], [1], [0, 0, 1, 1], [], []>} : vector<16x32xbf16>, vector<32x96xbf16>, vector<16x96xf32> -> vector<16x96xf32>
    %c0_17 = arith.constant 0 : index
    %c0_18 = arith.constant 0 : index
    %c0_19 = arith.constant 0 : index
    %35 = vector.load %arg6[%c0_17, %c0_18, %c0_19] : memref<1x1x96xf32, #tpu.memory_space<vmem>>, vector<1x1x96xf32>
    %36 = vector.shape_cast %35 : vector<1x1x96xf32> to vector<1x96xf32>
    %37 = vector.broadcast %36 : vector<1x96xf32> to vector<16x96xf32>
    %38 = arith.addf %34, %37 : vector<16x96xf32>
    %39 = vector.extract_strided_slice %38 {offsets = [0, 0], sizes = [16, 32], strides = [1, 1]} : vector<16x96xf32> to vector<16x32xf32>
    %40 = vector.shape_cast %39 : vector<16x32xf32> to vector<2x8x32xf32>
    %41 = arith.truncf %40 : vector<2x8x32xf32> to vector<2x8x32xbf16>
    %42 = vector.extract_strided_slice %38 {offsets = [0, 32], sizes = [16, 32], strides = [1, 1]} : vector<16x96xf32> to vector<16x32xf32>
    %43 = vector.shape_cast %42 : vector<16x32xf32> to vector<2x8x32xf32>
    %44 = arith.truncf %43 : vector<2x8x32xf32> to vector<2x8x32xbf16>
    %45 = vector.extract_strided_slice %38 {offsets = [0, 64], sizes = [16, 32], strides = [1, 1]} : vector<16x96xf32> to vector<16x32xf32>
    %46 = vector.shape_cast %45 : vector<16x32xf32> to vector<2x8x32xf32>
    %47 = arith.truncf %46 : vector<2x8x32xf32> to vector<2x8x32xbf16>
    %c0_20 = arith.constant 0 : index
    %c0_21 = arith.constant 0 : index
    %c0_22 = arith.constant 0 : index
    %48 = vector.load %arg7[%c0_20, %c0_21, %c0_22] : memref<1x32x32xbf16, #tpu.memory_space<vmem>>, vector<1x32x32xbf16>
    %49 = vector.shape_cast %48 : vector<1x32x32xbf16> to vector<32x32xbf16>
    %cst_23 = arith.constant 0.000000e+00 : f32
    %50 = vector.broadcast %cst_23 : f32 to vector<16x32xf32>
    %51 = vector.extract_strided_slice %41 {offsets = [0, 0, 0], sizes = [2, 8, 8], strides = [1, 1, 1]} : vector<2x8x32xbf16> to vector<2x8x8xbf16>
    %52 = vector.extract_strided_slice %44 {offsets = [0, 0, 0], sizes = [2, 8, 8], strides = [1, 1, 1]} : vector<2x8x32xbf16> to vector<2x8x8xbf16>
    %cst_24 = arith.constant dense<0.000000e+00> : vector<2x8x8xf32>
    %53 = tpu.matmul %51, %52, %cst_24 {dimension_numbers = #tpu.dot_dimension_numbers<[2], [2], [1], [1], [0, 0, 0, 1, 1, 1], [0], [0]>} : vector<2x8x8xbf16>, vector<2x8x8xbf16>, vector<2x8x8xf32> -> vector<2x8x8xf32>
    %cst_25 = arith.constant dense<0xFF800000> : vector<2x8xf32>
    %54 = vector.multi_reduction <maximumf>, %53, %cst_25 [2] : vector<2x8x8xf32> to vector<2x8xf32>
    %55 = vector.shape_cast %54 : vector<2x8xf32> to vector<2x8x1xf32>
    %56 = vector.broadcast %55 : vector<2x8x1xf32> to vector<2x8x8xf32>
    %57 = arith.subf %53, %56 : vector<2x8x8xf32>
    %58 = math.exp %57 : vector<2x8x8xf32>
    %cst_26 = arith.constant dense<0.000000e+00> : vector<2x8xf32>
    %59 = vector.multi_reduction <add>, %58, %cst_26 [2] : vector<2x8x8xf32> to vector<2x8xf32>
    %60 = vector.shape_cast %59 : vector<2x8xf32> to vector<2x8x1xf32>
    %61 = tpu.reciprocal %60 {approx = true} : vector<2x8x1xf32> -> vector<2x8x1xf32>
    %62 = vector.broadcast %61 : vector<2x8x1xf32> to vector<2x8x8xf32>
    %63 = arith.mulf %58, %62 : vector<2x8x8xf32>
    %64 = arith.truncf %63 : vector<2x8x8xf32> to vector<2x8x8xbf16>
    %65 = vector.extract_strided_slice %47 {offsets = [0, 0, 0], sizes = [2, 8, 8], strides = [1, 1, 1]} : vector<2x8x32xbf16> to vector<2x8x8xbf16>
    %cst_27 = arith.constant dense<0.000000e+00> : vector<2x8x8xf32>
    %66 = tpu.matmul %64, %65, %cst_27 {dimension_numbers = #tpu.dot_dimension_numbers<[2], [1], [1], [2], [0, 0, 0, 1, 1, 2], [0], [0]>} : vector<2x8x8xbf16>, vector<2x8x8xbf16>, vector<2x8x8xf32> -> vector<2x8x8xf32>
    %67 = vector.shape_cast %66 : vector<2x8x8xf32> to vector<16x8xf32>
    %68 = arith.truncf %67 : vector<16x8xf32> to vector<16x8xbf16>
    %69 = vector.extract_strided_slice %49 {offsets = [0, 0], sizes = [8, 32], strides = [1, 1]} : vector<32x32xbf16> to vector<8x32xbf16>
    %cst_28 = arith.constant dense<0.000000e+00> : vector<16x32xf32>
    %70 = tpu.matmul %68, %69, %cst_28 {dimension_numbers = #tpu.dot_dimension_numbers<[1], [0], [0], [1], [0, 0, 1, 1], [], []>} : vector<16x8xbf16>, vector<8x32xbf16>, vector<16x32xf32> -> vector<16x32xf32>
    %71 = arith.addf %50, %70 : vector<16x32xf32>
    %72 = vector.extract_strided_slice %41 {offsets = [0, 0, 8], sizes = [2, 8, 8], strides = [1, 1, 1]} : vector<2x8x32xbf16> to vector<2x8x8xbf16>
    %73 = vector.extract_strided_slice %44 {offsets = [0, 0, 8], sizes = [2, 8, 8], strides = [1, 1, 1]} : vector<2x8x32xbf16> to vector<2x8x8xbf16>
    %cst_29 = arith.constant dense<0.000000e+00> : vector<2x8x8xf32>
    %74 = tpu.matmul %72, %73, %cst_29 {dimension_numbers = #tpu.dot_dimension_numbers<[2], [2], [1], [1], [0, 0, 0, 1, 1, 1], [0], [0]>} : vector<2x8x8xbf16>, vector<2x8x8xbf16>, vector<2x8x8xf32> -> vector<2x8x8xf32>
    %cst_30 = arith.constant dense<0xFF800000> : vector<2x8xf32>
    %75 = vector.multi_reduction <maximumf>, %74, %cst_30 [2] : vector<2x8x8xf32> to vector<2x8xf32>
    %76 = vector.shape_cast %75 : vector<2x8xf32> to vector<2x8x1xf32>
    %77 = vector.broadcast %76 : vector<2x8x1xf32> to vector<2x8x8xf32>
    %78 = arith.subf %74, %77 : vector<2x8x8xf32>
    %79 = math.exp %78 : vector<2x8x8xf32>
    %cst_31 = arith.constant dense<0.000000e+00> : vector<2x8xf32>
    %80 = vector.multi_reduction <add>, %79, %cst_31 [2] : vector<2x8x8xf32> to vector<2x8xf32>
    %81 = vector.shape_cast %80 : vector<2x8xf32> to vector<2x8x1xf32>
    %82 = tpu.reciprocal %81 {approx = true} : vector<2x8x1xf32> -> vector<2x8x1xf32>
    %83 = vector.broadcast %82 : vector<2x8x1xf32> to vector<2x8x8xf32>
    %84 = arith.mulf %79, %83 : vector<2x8x8xf32>
    %85 = arith.truncf %84 : vector<2x8x8xf32> to vector<2x8x8xbf16>
    %86 = vector.extract_strided_slice %47 {offsets = [0, 0, 8], sizes = [2, 8, 8], strides = [1, 1, 1]} : vector<2x8x32xbf16> to vector<2x8x8xbf16>
    %cst_32 = arith.constant dense<0.000000e+00> : vector<2x8x8xf32>
    %87 = tpu.matmul %85, %86, %cst_32 {dimension_numbers = #tpu.dot_dimension_numbers<[2], [1], [1], [2], [0, 0, 0, 1, 1, 2], [0], [0]>} : vector<2x8x8xbf16>, vector<2x8x8xbf16>, vector<2x8x8xf32> -> vector<2x8x8xf32>
    %88 = vector.shape_cast %87 : vector<2x8x8xf32> to vector<16x8xf32>
    %89 = arith.truncf %88 : vector<16x8xf32> to vector<16x8xbf16>
    %90 = vector.extract_strided_slice %49 {offsets = [8, 0], sizes = [8, 32], strides = [1, 1]} : vector<32x32xbf16> to vector<8x32xbf16>
    %cst_33 = arith.constant dense<0.000000e+00> : vector<16x32xf32>
    %91 = tpu.matmul %89, %90, %cst_33 {dimension_numbers = #tpu.dot_dimension_numbers<[1], [0], [0], [1], [0, 0, 1, 1], [], []>} : vector<16x8xbf16>, vector<8x32xbf16>, vector<16x32xf32> -> vector<16x32xf32>
    %92 = arith.addf %71, %91 : vector<16x32xf32>
    %93 = vector.extract_strided_slice %41 {offsets = [0, 0, 16], sizes = [2, 8, 8], strides = [1, 1, 1]} : vector<2x8x32xbf16> to vector<2x8x8xbf16>
    %94 = vector.extract_strided_slice %44 {offsets = [0, 0, 16], sizes = [2, 8, 8], strides = [1, 1, 1]} : vector<2x8x32xbf16> to vector<2x8x8xbf16>
    %cst_34 = arith.constant dense<0.000000e+00> : vector<2x8x8xf32>
    %95 = tpu.matmul %93, %94, %cst_34 {dimension_numbers = #tpu.dot_dimension_numbers<[2], [2], [1], [1], [0, 0, 0, 1, 1, 1], [0], [0]>} : vector<2x8x8xbf16>, vector<2x8x8xbf16>, vector<2x8x8xf32> -> vector<2x8x8xf32>
    %cst_35 = arith.constant dense<0xFF800000> : vector<2x8xf32>
    %96 = vector.multi_reduction <maximumf>, %95, %cst_35 [2] : vector<2x8x8xf32> to vector<2x8xf32>
    %97 = vector.shape_cast %96 : vector<2x8xf32> to vector<2x8x1xf32>
    %98 = vector.broadcast %97 : vector<2x8x1xf32> to vector<2x8x8xf32>
    %99 = arith.subf %95, %98 : vector<2x8x8xf32>
    %100 = math.exp %99 : vector<2x8x8xf32>
    %cst_36 = arith.constant dense<0.000000e+00> : vector<2x8xf32>
    %101 = vector.multi_reduction <add>, %100, %cst_36 [2] : vector<2x8x8xf32> to vector<2x8xf32>
    %102 = vector.shape_cast %101 : vector<2x8xf32> to vector<2x8x1xf32>
    %103 = tpu.reciprocal %102 {approx = true} : vector<2x8x1xf32> -> vector<2x8x1xf32>
    %104 = vector.broadcast %103 : vector<2x8x1xf32> to vector<2x8x8xf32>
    %105 = arith.mulf %100, %104 : vector<2x8x8xf32>
    %106 = arith.truncf %105 : vector<2x8x8xf32> to vector<2x8x8xbf16>
    %107 = vector.extract_strided_slice %47 {offsets = [0, 0, 16], sizes = [2, 8, 8], strides = [1, 1, 1]} : vector<2x8x32xbf16> to vector<2x8x8xbf16>
    %cst_37 = arith.constant dense<0.000000e+00> : vector<2x8x8xf32>
    %108 = tpu.matmul %106, %107, %cst_37 {dimension_numbers = #tpu.dot_dimension_numbers<[2], [1], [1], [2], [0, 0, 0, 1, 1, 2], [0], [0]>} : vector<2x8x8xbf16>, vector<2x8x8xbf16>, vector<2x8x8xf32> -> vector<2x8x8xf32>
    %109 = vector.shape_cast %108 : vector<2x8x8xf32> to vector<16x8xf32>
    %110 = arith.truncf %109 : vector<16x8xf32> to vector<16x8xbf16>
    %111 = vector.extract_strided_slice %49 {offsets = [16, 0], sizes = [8, 32], strides = [1, 1]} : vector<32x32xbf16> to vector<8x32xbf16>
    %cst_38 = arith.constant dense<0.000000e+00> : vector<16x32xf32>
    %112 = tpu.matmul %110, %111, %cst_38 {dimension_numbers = #tpu.dot_dimension_numbers<[1], [0], [0], [1], [0, 0, 1, 1], [], []>} : vector<16x8xbf16>, vector<8x32xbf16>, vector<16x32xf32> -> vector<16x32xf32>
    %113 = arith.addf %92, %112 : vector<16x32xf32>
    %114 = vector.extract_strided_slice %41 {offsets = [0, 0, 24], sizes = [2, 8, 8], strides = [1, 1, 1]} : vector<2x8x32xbf16> to vector<2x8x8xbf16>
    %115 = vector.extract_strided_slice %44 {offsets = [0, 0, 24], sizes = [2, 8, 8], strides = [1, 1, 1]} : vector<2x8x32xbf16> to vector<2x8x8xbf16>
    %cst_39 = arith.constant dense<0.000000e+00> : vector<2x8x8xf32>
    %116 = tpu.matmul %114, %115, %cst_39 {dimension_numbers = #tpu.dot_dimension_numbers<[2], [2], [1], [1], [0, 0, 0, 1, 1, 1], [0], [0]>} : vector<2x8x8xbf16>, vector<2x8x8xbf16>, vector<2x8x8xf32> -> vector<2x8x8xf32>
    %cst_40 = arith.constant dense<0xFF800000> : vector<2x8xf32>
    %117 = vector.multi_reduction <maximumf>, %116, %cst_40 [2] : vector<2x8x8xf32> to vector<2x8xf32>
    %118 = vector.shape_cast %117 : vector<2x8xf32> to vector<2x8x1xf32>
    %119 = vector.broadcast %118 : vector<2x8x1xf32> to vector<2x8x8xf32>
    %120 = arith.subf %116, %119 : vector<2x8x8xf32>
    %121 = math.exp %120 : vector<2x8x8xf32>
    %cst_41 = arith.constant dense<0.000000e+00> : vector<2x8xf32>
    %122 = vector.multi_reduction <add>, %121, %cst_41 [2] : vector<2x8x8xf32> to vector<2x8xf32>
    %123 = vector.shape_cast %122 : vector<2x8xf32> to vector<2x8x1xf32>
    %124 = tpu.reciprocal %123 {approx = true} : vector<2x8x1xf32> -> vector<2x8x1xf32>
    %125 = vector.broadcast %124 : vector<2x8x1xf32> to vector<2x8x8xf32>
    %126 = arith.mulf %121, %125 : vector<2x8x8xf32>
    %127 = arith.truncf %126 : vector<2x8x8xf32> to vector<2x8x8xbf16>
    %128 = vector.extract_strided_slice %47 {offsets = [0, 0, 24], sizes = [2, 8, 8], strides = [1, 1, 1]} : vector<2x8x32xbf16> to vector<2x8x8xbf16>
    %cst_42 = arith.constant dense<0.000000e+00> : vector<2x8x8xf32>
    %129 = tpu.matmul %127, %128, %cst_42 {dimension_numbers = #tpu.dot_dimension_numbers<[2], [1], [1], [2], [0, 0, 0, 1, 1, 2], [0], [0]>} : vector<2x8x8xbf16>, vector<2x8x8xbf16>, vector<2x8x8xf32> -> vector<2x8x8xf32>
    %130 = vector.shape_cast %129 : vector<2x8x8xf32> to vector<16x8xf32>
    %131 = arith.truncf %130 : vector<16x8xf32> to vector<16x8xbf16>
    %132 = vector.extract_strided_slice %49 {offsets = [24, 0], sizes = [8, 32], strides = [1, 1]} : vector<32x32xbf16> to vector<8x32xbf16>
    %cst_43 = arith.constant dense<0.000000e+00> : vector<16x32xf32>
    %133 = tpu.matmul %131, %132, %cst_43 {dimension_numbers = #tpu.dot_dimension_numbers<[1], [0], [0], [1], [0, 0, 1, 1], [], []>} : vector<16x8xbf16>, vector<8x32xbf16>, vector<16x32xf32> -> vector<16x32xf32>
    %134 = arith.addf %113, %133 : vector<16x32xf32>
    %135 = arith.addf %4, %134 : vector<16x32xf32>
    %c0_44 = arith.constant 0 : index
    %c0_45 = arith.constant 0 : index
    %c0_46 = arith.constant 0 : index
    %136 = vector.load %arg8[%c0_44, %c0_45, %c0_46] : memref<1x1x32xf32, #tpu.memory_space<vmem>>, vector<1x1x32xf32>
    %137 = vector.shape_cast %136 : vector<1x1x32xf32> to vector<1x32xf32>
    %138 = vector.broadcast %137 : vector<1x32xf32> to vector<16x32xf32>
    %139 = arith.addf %135, %138 : vector<16x32xf32>
    %c0_47 = arith.constant 0 : index
    %c0_48 = arith.constant 0 : index
    %c0_49 = arith.constant 0 : index
    %140 = vector.load %arg9[%c0_47, %c0_48, %c0_49] : memref<1x1x32xf32, #tpu.memory_space<vmem>>, vector<1x1x32xf32>
    %141 = vector.shape_cast %140 : vector<1x1x32xf32> to vector<1x32xf32>
    %c0_50 = arith.constant 0 : index
    %c0_51 = arith.constant 0 : index
    %c0_52 = arith.constant 0 : index
    %142 = vector.load %arg10[%c0_50, %c0_51, %c0_52] : memref<1x1x32xf32, #tpu.memory_space<vmem>>, vector<1x1x32xf32>
    %143 = vector.shape_cast %142 : vector<1x1x32xf32> to vector<1x32xf32>
    %cst_53 = arith.constant dense<0.000000e+00> : vector<16xf32>
    %144 = vector.multi_reduction <add>, %139, %cst_53 [1] : vector<16x32xf32> to vector<16xf32>
    %145 = vector.shape_cast %144 : vector<16xf32> to vector<16x1xf32>
    %cst_54 = arith.constant 3.200000e+01 : f32
    %146 = vector.broadcast %cst_54 : f32 to vector<16x1xf32>
    %147 = arith.divf %145, %146 : vector<16x1xf32>
    %148 = vector.broadcast %147 : vector<16x1xf32> to vector<16x32xf32>
    %149 = arith.subf %139, %148 : vector<16x32xf32>
    %150 = arith.mulf %149, %149 : vector<16x32xf32>
    %cst_55 = arith.constant dense<0.000000e+00> : vector<16xf32>
    %151 = vector.multi_reduction <add>, %150, %cst_55 [1] : vector<16x32xf32> to vector<16xf32>
    %152 = vector.shape_cast %151 : vector<16xf32> to vector<16x1xf32>
    %cst_56 = arith.constant 3.200000e+01 : f32
    %153 = vector.broadcast %cst_56 : f32 to vector<16x1xf32>
    %154 = arith.divf %152, %153 : vector<16x1xf32>
    %155 = vector.broadcast %147 : vector<16x1xf32> to vector<16x32xf32>
    %156 = arith.subf %139, %155 : vector<16x32xf32>
    %cst_57 = arith.constant 9.99999974E-6 : f32
    %157 = vector.broadcast %cst_57 : f32 to vector<16x1xf32>
    %158 = arith.addf %154, %157 : vector<16x1xf32>
    %159 = math.rsqrt %158 : vector<16x1xf32>
    %160 = vector.broadcast %159 : vector<16x1xf32> to vector<16x32xf32>
    %161 = arith.mulf %156, %160 : vector<16x32xf32>
    %162 = vector.broadcast %141 : vector<1x32xf32> to vector<16x32xf32>
    %163 = arith.mulf %161, %162 : vector<16x32xf32>
    %164 = vector.broadcast %143 : vector<1x32xf32> to vector<16x32xf32>
    %165 = arith.addf %163, %164 : vector<16x32xf32>
    %166 = arith.truncf %165 : vector<16x32xf32> to vector<16x32xbf16>
    %c0_58 = arith.constant 0 : index
    %c0_59 = arith.constant 0 : index
    %c0_60 = arith.constant 0 : index
    %167 = vector.load %arg11[%c0_58, %c0_59, %c0_60] : memref<1x32x128xbf16, #tpu.memory_space<vmem>>, vector<1x32x128xbf16>
    %168 = vector.shape_cast %167 : vector<1x32x128xbf16> to vector<32x128xbf16>
    %cst_61 = arith.constant dense<0.000000e+00> : vector<16x128xf32>
    %169 = tpu.matmul %166, %168, %cst_61 {dimension_numbers = #tpu.dot_dimension_numbers<[1], [0], [0], [1], [0, 0, 1, 1], [], []>} : vector<16x32xbf16>, vector<32x128xbf16>, vector<16x128xf32> -> vector<16x128xf32>
    %c0_62 = arith.constant 0 : index
    %c0_63 = arith.constant 0 : index
    %c0_64 = arith.constant 0 : index
    %170 = vector.load %arg12[%c0_62, %c0_63, %c0_64] : memref<1x1x128xf32, #tpu.memory_space<vmem>>, vector<1x1x128xf32>
    %171 = vector.shape_cast %170 : vector<1x1x128xf32> to vector<1x128xf32>
    %172 = vector.broadcast %171 : vector<1x128xf32> to vector<16x128xf32>
    %173 = arith.addf %169, %172 : vector<16x128xf32>
    %cst_65 = arith.constant 1.702000e+00 : f32
    %174 = vector.broadcast %cst_65 : f32 to vector<16x128xf32>
    %175 = arith.mulf %174, %173 : vector<16x128xf32>
    %176 = arith.negf %175 : vector<16x128xf32>
    %177 = math.exp %176 : vector<16x128xf32>
    %cst_66 = arith.constant 1.000000e+00 : f32
    %178 = vector.broadcast %cst_66 : f32 to vector<16x128xf32>
    %179 = arith.addf %178, %177 : vector<16x128xf32>
    %180 = arith.divf %178, %179 : vector<16x128xf32>
    %181 = arith.mulf %173, %180 : vector<16x128xf32>
    %182 = arith.truncf %181 : vector<16x128xf32> to vector<16x128xbf16>
    %c0_67 = arith.constant 0 : index
    %c0_68 = arith.constant 0 : index
    %c0_69 = arith.constant 0 : index
    %183 = vector.load %arg13[%c0_67, %c0_68, %c0_69] : memref<1x128x32xbf16, #tpu.memory_space<vmem>>, vector<1x128x32xbf16>
    %184 = vector.shape_cast %183 : vector<1x128x32xbf16> to vector<128x32xbf16>
    %cst_70 = arith.constant dense<0.000000e+00> : vector<16x32xf32>
    %185 = tpu.matmul %182, %184, %cst_70 {dimension_numbers = #tpu.dot_dimension_numbers<[1], [0], [0], [1], [0, 0, 1, 1], [], []>} : vector<16x128xbf16>, vector<128x32xbf16>, vector<16x32xf32> -> vector<16x32xf32>
    %186 = arith.addf %139, %185 : vector<16x32xf32>
    %c0_71 = arith.constant 0 : index
    %c0_72 = arith.constant 0 : index
    %c0_73 = arith.constant 0 : index
    %187 = vector.load %arg14[%c0_71, %c0_72, %c0_73] : memref<1x1x32xf32, #tpu.memory_space<vmem>>, vector<1x1x32xf32>
    %188 = vector.shape_cast %187 : vector<1x1x32xf32> to vector<1x32xf32>
    %189 = vector.broadcast %188 : vector<1x32xf32> to vector<16x32xf32>
    %190 = arith.addf %186, %189 : vector<16x32xf32>
    %c1_i32 = arith.constant 1 : i32
    %191 = arith.cmpi slt, %arg1, %c1_i32 : i32
    %192 = arith.extui %191 : i1 to i32
    %c0_i32_74 = arith.constant 0 : i32
    %193 = arith.cmpi ne, %192, %c0_i32_74 : i32
    scf.if %193 {
      %197 = vector.shape_cast %190 : vector<16x32xf32> to vector<2x8x32xf32>
      %c0_77 = arith.constant 0 : index
      %c0_78 = arith.constant 0 : index
      %c0_79 = arith.constant 0 : index
      %198 = vector.load %arg16[%c0_77, %c0_78, %c0_79] : memref<2x8x32xf32, #tpu.memory_space<vmem>>, vector<2x8x32xf32>
      tpu.vector_store %arg16[%c0_77, %c0_78, %c0_79], %197 {strides = array<i32>} : memref<2x8x32xf32, #tpu.memory_space<vmem>>, vector<2x8x32xf32>,
    } else {
    }
    %c1_i32_75 = arith.constant 1 : i32
    %194 = arith.cmpi eq, %arg1, %c1_i32_75 : i32
    %195 = arith.extui %194 : i1 to i32
    %c0_i32_76 = arith.constant 0 : i32
    %196 = arith.cmpi ne, %195, %c0_i32_76 : i32
    scf.if %196 {
      %197 = vector.shape_cast %190 : vector<16x32xf32> to vector<2x8x32xf32>
      %c0_77 = arith.constant 0 : index
      %c0_78 = arith.constant 0 : index
      %c0_79 = arith.constant 0 : index
      %198 = vector.load %arg15[%c0_77, %c0_78, %c0_79] : memref<2x8x32xf32, #tpu.memory_space<vmem>>, vector<2x8x32xf32>
      tpu.vector_store %arg15[%c0_77, %c0_78, %c0_79], %197 {strides = array<i32>} : memref<2x8x32xf32, #tpu.memory_space<vmem>>, vector<2x8x32xf32>,
    } else {
    }
    return
  }
  func.func @transform_0(%arg0: i32, %arg1: i32) -> (i32, i32, i32) {
    %c0_i32 = arith.constant 0 : i32
    %c0_i32_0 = arith.constant 0 : i32
    %c0_i32_1 = arith.constant 0 : i32
    return %arg0, %c0_i32, %c0_i32_0 : i32, i32, i32
  }
  func.func @transform_1(%arg0: i32, %arg1: i32) -> (i32, i32, i32) {
    %c0_i32 = arith.constant 0 : i32
    %c0_i32_0 = arith.constant 0 : i32
    %c0_i32_1 = arith.constant 0 : i32
    return %arg1, %c0_i32, %c0_i32_0 : i32, i32, i32
  }
  func.func @transform_2(%arg0: i32, %arg1: i32) -> (i32, i32, i32) {
    %c0_i32 = arith.constant 0 : i32
    %c0_i32_0 = arith.constant 0 : i32
    %c0_i32_1 = arith.constant 0 : i32
    return %arg1, %c0_i32, %c0_i32_0 : i32, i32, i32
  }
  func.func @transform_3(%arg0: i32, %arg1: i32) -> (i32, i32, i32) {
    %c0_i32 = arith.constant 0 : i32
    %c0_i32_0 = arith.constant 0 : i32
    %c0_i32_1 = arith.constant 0 : i32
    return %arg1, %c0_i32, %c0_i32_0 : i32, i32, i32
  }
  func.func @transform_4(%arg0: i32, %arg1: i32) -> (i32, i32, i32) {
    %c0_i32 = arith.constant 0 : i32
    %c0_i32_0 = arith.constant 0 : i32
    %c0_i32_1 = arith.constant 0 : i32
    return %arg1, %c0_i32, %c0_i32_0 : i32, i32, i32
  }
  func.func @transform_5(%arg0: i32, %arg1: i32) -> (i32, i32, i32) {
    %c0_i32 = arith.constant 0 : i32
    %c0_i32_0 = arith.constant 0 : i32
    %c0_i32_1 = arith.constant 0 : i32
    return %arg1, %c0_i32, %c0_i32_0 : i32, i32, i32
  }
  func.func @transform_6(%arg0: i32, %arg1: i32) -> (i32, i32, i32) {
    %c0_i32 = arith.constant 0 : i32
    %c0_i32_0 = arith.constant 0 : i32
    %c0_i32_1 = arith.constant 0 : i32
    return %arg1, %c0_i32, %c0_i32_0 : i32, i32, i32
  }
  func.func @transform_7(%arg0: i32, %arg1: i32) -> (i32, i32, i32) {
    %c0_i32 = arith.constant 0 : i32
    %c0_i32_0 = arith.constant 0 : i32
    %c0_i32_1 = arith.constant 0 : i32
    return %arg1, %c0_i32, %c0_i32_0 : i32, i32, i32
  }
  func.func @transform_8(%arg0: i32, %arg1: i32) -> (i32, i32, i32) {
    %c0_i32 = arith.constant 0 : i32
    %c0_i32_0 = arith.constant 0 : i32
    %c0_i32_1 = arith.constant 0 : i32
    return %arg1, %c0_i32, %c0_i32_0 : i32, i32, i32
  }
  func.func @transform_9(%arg0: i32, %arg1: i32) -> (i32, i32, i32) {
    %c0_i32 = arith.constant 0 : i32
    %c0_i32_0 = arith.constant 0 : i32
    %c0_i32_1 = arith.constant 0 : i32
    return %arg1, %c0_i32, %c0_i32_0 : i32, i32, i32
  }
  func.func @transform_10(%arg0: i32, %arg1: i32) -> (i32, i32, i32) {
    %c0_i32 = arith.constant 0 : i32
    %c0_i32_0 = arith.constant 0 : i32
    %c0_i32_1 = arith.constant 0 : i32
    return %arg1, %c0_i32, %c0_i32_0 : i32, i32, i32
  }
  func.func @transform_11(%arg0: i32, %arg1: i32) -> (i32, i32, i32) {
    %c0_i32 = arith.constant 0 : i32
    %c0_i32_0 = arith.constant 0 : i32
    %c0_i32_1 = arith.constant 0 : i32
    return %arg1, %c0_i32, %c0_i32_0 : i32, i32, i32
  }
  func.func @transform_12(%arg0: i32, %arg1: i32) -> (i32, i32, i32) {
    %c0_i32 = arith.constant 0 : i32
    %c0_i32_0 = arith.constant 0 : i32
    %c0_i32_1 = arith.constant 0 : i32
    return %arg1, %c0_i32, %c0_i32_0 : i32, i32, i32
  }
  func.func @transform_13(%arg0: i32, %arg1: i32) -> (i32, i32, i32) {
    %c0_i32 = arith.constant 0 : i32
    %c0_i32_0 = arith.constant 0 : i32
    %c0_i32_1 = arith.constant 0 : i32
    return %arg0, %c0_i32, %c0_i32_0 : i32, i32, i32
  }
}

</mosaic_0001>

<llo_original>
// kernel: tpu_custom_call.1
$region0: #{tpu_custom_call.1}
  #allocation0 [shape = 'u32[]', space=smem, size = 0x4, offset = 0x4, fixed_abs, tag = 'smem constant byte address 0x4 - core index']
  #allocation1 [shape = 'u32[144,128]{1,0:T(1,128)}', space=vmem, size = 0x12000, scoped, tag = 'internal scratch']
  #allocation2 [shape = 'f32[2,8,32]{2,1,0:T(8,128)}', space=vmem, size = 0x2000, scoped, tag = 'scratch operand']
  %s0 = inlined_call_operand.vmem [shape: f32[2,8,32], index: 0, kind: input, shape index: {}]
  %s1 = inlined_call_operand.vmem [shape: f32[2,1,32], index: 1, kind: input, shape index: {}]
  %s2 = inlined_call_operand.vmem [shape: f32[2,1,32], index: 2, kind: input, shape index: {}]
  %s3 = inlined_call_operand.vmem [shape: bf16[2,32,96], index: 3, kind: input, shape index: {}]
  %s4 = inlined_call_operand.vmem [shape: f32[2,1,96], index: 4, kind: input, shape index: {}]
  %s5 = inlined_call_operand.vmem [shape: bf16[2,32,32], index: 5, kind: input, shape index: {}]
  %s6 = inlined_call_operand.vmem [shape: f32[2,1,32], index: 6, kind: input, shape index: {}]
  %s7 = inlined_call_operand.vmem [shape: f32[2,1,32], index: 7, kind: input, shape index: {}]
  %s8 = inlined_call_operand.vmem [shape: f32[2,1,32], index: 8, kind: input, shape index: {}]
  %s9 = inlined_call_operand.vmem [shape: bf16[2,32,128], index: 9, kind: input, shape index: {}]
  %s10 = inlined_call_operand.vmem [shape: f32[2,1,128], index: 10, kind: input, shape index: {}]
  %s11 = inlined_call_operand.vmem [shape: bf16[2,128,32], index: 11, kind: input, shape index: {}]
  %s12 = inlined_call_operand.vmem [shape: f32[2,1,32], index: 12, kind: input, shape index: {}]
  %s13 = inlined_call_operand.hbm [shape: f32[2,8,32], index: 13, kind: output, shape index: {}]
  %s14 = sld [smem:[#allocation0]]
  $region97: #{tpu_custom_call.1} parent=0
    _
  %s16 = ssub.s32 1, %s14
  %s17 = scalar_select 0, %s16, %s14
  $region1: #{tpu_custom_call.1} parent=0
    #allocation3 [shape = 'u8[8192]{0}', space=vmem, size = 0x2000, scoped, tag = 'output window, operand 0, single buffered']
    #allocation4 [shape = 's32[2]{0}', space=sflag, size = 0x8, scoped, tag = 'scoped memory for tpu_custom_call.1']
    %18 = vsyncpa [#allocation4], 0
    loop: start=0, step=1, limit=4
    $region2: #{tpu_custom_call.1} parent=1 // loop_pre_header
      _
    $region3: #{tpu_custom_call.1} parent=1 // loop_header
      %s20 = sphi 0, %s24
      %p21 = scmp.ge.s32.totalorder %s20, 4
      %s27 = sphi 0, %s39
      %s28 = sphi 0, %s35
      %s29 = sphi 0, %s27
      %s30 = sphi 0, %s28
      %s31 = sphi 0, %s29
      %s32 = sphi 0, %s30
      %s42 = sphi 0, %s44
      %s45 = sphi 0, %s42
      %s46 = sphi 0, %s45
      %s62 = sphi 0, %s46
      %s68 = sphi 0, %s70
      %s71 = sphi 0, %s68
      %s72 = sphi 0, %s71
      %s88 = sphi 0, %s72
      %s94 = sphi 0, %s96
      %s97 = sphi 0, %s94
      %s98 = sphi 0, %s97
      %s114 = sphi 0, %s98
      %s120 = sphi 0, %s122
      %s123 = sphi 0, %s120
      %s124 = sphi 0, %s123
      %s140 = sphi 0, %s124
      %s146 = sphi 0, %s148
      %s149 = sphi 0, %s146
      %s150 = sphi 0, %s149
      %s166 = sphi 0, %s150
      %s172 = sphi 0, %s174
      %s175 = sphi 0, %s172
      %s176 = sphi 0, %s175
      %s192 = sphi 0, %s176
      %s198 = sphi 0, %s200
      %s201 = sphi 0, %s198
      %s202 = sphi 0, %s201
      %s218 = sphi 0, %s202
      %s224 = sphi 0, %s226
      %s227 = sphi 0, %s224
      %s228 = sphi 0, %s227
      %s244 = sphi 0, %s228
      %s250 = sphi 0, %s252
      %s253 = sphi 0, %s250
      %s254 = sphi 0, %s253
      %s270 = sphi 0, %s254
      %s276 = sphi 0, %s278
      %s279 = sphi 0, %s276
      %s280 = sphi 0, %s279
      %s296 = sphi 0, %s280
      %s302 = sphi 0, %s304
      %s305 = sphi 0, %s302
      %s306 = sphi 0, %s305
      %s322 = sphi 0, %s306
      %s328 = sphi 0, %s330
      %s331 = sphi 0, %s328
      %s332 = sphi 0, %s331
      %s348 = sphi 0, %s332
      %s354 = sphi 0, %s356
      %s357 = sphi 0, %s354
      %s358 = sphi 0, %s357
      %s374 = sphi 0, %s358
      %s380 = sphi 0, %s382
      %s383 = sphi 0, %s380
      %s384 = sphi 0, %s383
      %s400 = sphi 0, %s384
    $region4: #{tpu_custom_call.1} parent=1 // loop_header_branch
      %23 = sbr.rel (%p21) target = $region8
    $region5: #{tpu_custom_call.1} parent=1 // loop_body
      %s25 = ssub.s32 %s20, 1
      %s26 = ssub.s32 %s20, 2
      %s33 = sadd.s32 1, %s28
      %p34 = scmp.ge.s32.totalorder %s33, 2
      %s35 = scalar_select %p34, 0, %s33
      %s36 = sadd.s32 1, %s27
      %s37 = scalar_select %p34, %s36, %s27
      %p38 = scmp.ge.s32.totalorder %s37, 1
      %s39 = scalar_select %p38, 0, %s37
      %s40 = ssub.s32 %s27, %s39
      %p41 = scmp.eq.s32.totalorder %s40, 0
      %s43 = sadd.s32 %s42, 1
      %s44 = scalar_select %p41, %s42, %s43
      %p47 = pneg %p41
      %p48 = scmp.eq.s32.totalorder %s20, 1
      %p49 = por %p47, %p48
      %p50 = scmp.ne.s32.totalorder %s42, %s45
      %p51 = scmp.eq.s32.totalorder %s20, 0
      %p52 = por %p50, %p51
      %p53 = scmp.ne.s32.totalorder %s42, %s45
      %p54 = scmp.eq.s32.totalorder %s25, 1
      %p55 = por %p53, %p54
      %p56 = scmp.ne.s32.totalorder %s45, %s46
      %p57 = scmp.eq.s32.totalorder %s25, 0
      %p58 = por %p56, %p57
      %p59 = scmp.ne.s32.totalorder %s45, %s46
      %p60 = scmp.eq.s32.totalorder %s26, 1
      %p61 = por %p59, %p60
      %p63 = scmp.ne.s32.totalorder %s46, %s62
      %p64 = scmp.eq.s32.totalorder %s26, 0
      %p65 = por %p63, %p64
      %s66 = ssub.s32 %s28, %s35
      %p67 = scmp.eq.s32.totalorder %s66, 0
      %s69 = sadd.s32 %s68, 1
      %s70 = scalar_select %p67, %s68, %s69
      %p73 = pneg %p67
      %p74 = scmp.eq.s32.totalorder %s20, 1
      %p75 = por %p73, %p74
      %p76 = scmp.ne.s32.totalorder %s68, %s71
      %p77 = scmp.eq.s32.totalorder %s20, 0
      %p78 = por %p76, %p77
      %p79 = scmp.ne.s32.totalorder %s68, %s71
      %p80 = scmp.eq.s32.totalorder %s25, 1
      %p81 = por %p79, %p80
      %p82 = scmp.ne.s32.totalorder %s71, %s72
      %p83 = scmp.eq.s32.totalorder %s25, 0
      %p84 = por %p82, %p83
      %p85 = scmp.ne.s32.totalorder %s71, %s72
      %p86 = scmp.eq.s32.totalorder %s26, 1
      %p87 = por %p85, %p86
      %p89 = scmp.ne.s32.totalorder %s72, %s88
      %p90 = scmp.eq.s32.totalorder %s26, 0
      %p91 = por %p89, %p90
      %s92 = ssub.s32 %s28, %s35
      %p93 = scmp.eq.s32.totalorder %s92, 0
      %s95 = sadd.s32 %s94, 1
      %s96 = scalar_select %p93, %s94, %s95
      %p99 = pneg %p93
      %p100 = scmp.eq.s32.totalorder %s20, 1
      %p101 = por %p99, %p100
      %p102 = scmp.ne.s32.totalorder %s94, %s97
      %p103 = scmp.eq.s32.totalorder %s20, 0
      %p104 = por %p102, %p103
      %p105 = scmp.ne.s32.totalorder %s94, %s97
      %p106 = scmp.eq.s32.totalorder %s25, 1
      %p107 = por %p105, %p106
      %p108 = scmp.ne.s32.totalorder %s97, %s98
      %p109 = scmp.eq.s32.totalorder %s25, 0
      %p110 = por %p108, %p109
      %p111 = scmp.ne.s32.totalorder %s97, %s98
      %p112 = scmp.eq.s32.totalorder %s26, 1
      %p113 = por %p111, %p112
      %p115 = scmp.ne.s32.totalorder %s98, %s114
      %p116 = scmp.eq.s32.totalorder %s26, 0
      %p117 = por %p115, %p116
      %s118 = ssub.s32 %s28, %s35
      %p119 = scmp.eq.s32.totalorder %s118, 0
      %s121 = sadd.s32 %s120, 1
      %s122 = scalar_select %p119, %s120, %s121
      %p125 = pneg %p119
      %p126 = scmp.eq.s32.totalorder %s20, 1
      %p127 = por %p125, %p126
      %p128 = scmp.ne.s32.totalorder %s120, %s123
      %p129 = scmp.eq.s32.totalorder %s20, 0
      %p130 = por %p128, %p129
      %p131 = scmp.ne.s32.totalorder %s120, %s123
      %p132 = scmp.eq.s32.totalorder %s25, 1
      %p133 = por %p131, %p132
      %p134 = scmp.ne.s32.totalorder %s123, %s124
      %p135 = scmp.eq.s32.totalorder %s25, 0
      %p136 = por %p134, %p135
      %p137 = scmp.ne.s32.totalorder %s123, %s124
      %p138 = scmp.eq.s32.totalorder %s26, 1
      %p139 = por %p137, %p138
      %p141 = scmp.ne.s32.totalorder %s124, %s140
      %p142 = scmp.eq.s32.totalorder %s26, 0
      %p143 = por %p141, %p142
      %s144 = ssub.s32 %s28, %s35
      %p145 = scmp.eq.s32.totalorder %s144, 0
      %s147 = sadd.s32 %s146, 1
      %s148 = scalar_select %p145, %s146, %s147
      %p151 = pneg %p145
      %p152 = scmp.eq.s32.totalorder %s20, 1
      %p153 = por %p151, %p152
      %p154 = scmp.ne.s32.totalorder %s146, %s149
      %p155 = scmp.eq.s32.totalorder %s20, 0
      %p156 = por %p154, %p155
      %p157 = scmp.ne.s32.totalorder %s146, %s149
      %p158 = scmp.eq.s32.totalorder %s25, 1
      %p159 = por %p157, %p158
      %p160 = scmp.ne.s32.totalorder %s149, %s150
      %p161 = scmp.eq.s32.totalorder %s25, 0
      %p162 = por %p160, %p161
      %p163 = scmp.ne.s32.totalorder %s149, %s150
      %p164 = scmp.eq.s32.totalorder %s26, 1
      %p165 = por %p163, %p164
      %p167 = scmp.ne.s32.totalorder %s150, %s166
      %p168 = scmp.eq.s32.totalorder %s26, 0
      %p169 = por %p167, %p168
      %s170 = ssub.s32 %s28, %s35
      %p171 = scmp.eq.s32.totalorder %s170, 0
      %s173 = sadd.s32 %s172, 1
      %s174 = scalar_select %p171, %s172, %s173
      %p177 = pneg %p171
      %p178 = scmp.eq.s32.totalorder %s20, 1
      %p179 = por %p177, %p178
      %p180 = scmp.ne.s32.totalorder %s172, %s175
      %p181 = scmp.eq.s32.totalorder %s20, 0
      %p182 = por %p180, %p181
      %p183 = scmp.ne.s32.totalorder %s172, %s175
      %p184 = scmp.eq.s32.totalorder %s25, 1
      %p185 = por %p183, %p184
      %p186 = scmp.ne.s32.totalorder %s175, %s176
      %p187 = scmp.eq.s32.totalorder %s25, 0
      %p188 = por %p186, %p187
      %p189 = scmp.ne.s32.totalorder %s175, %s176
      %p190 = scmp.eq.s32.totalorder %s26, 1
      %p191 = por %p189, %p190
      %p193 = scmp.ne.s32.totalorder %s176, %s192
      %p194 = scmp.eq.s32.totalorder %s26, 0
      %p195 = por %p193, %p194
      %s196 = ssub.s32 %s28, %s35
      %p197 = scmp.eq.s32.totalorder %s196, 0
      %s199 = sadd.s32 %s198, 1
      %s200 = scalar_select %p197, %s198, %s199
      %p203 = pneg %p197
      %p204 = scmp.eq.s32.totalorder %s20, 1
      %p205 = por %p203, %p204
      %p206 = scmp.ne.s32.totalorder %s198, %s201
      %p207 = scmp.eq.s32.totalorder %s20, 0
      %p208 = por %p206, %p207
      %p209 = scmp.ne.s32.totalorder %s198, %s201
      %p210 = scmp.eq.s32.totalorder %s25, 1
      %p211 = por %p209, %p210
      %p212 = scmp.ne.s32.totalorder %s201, %s202
      %p213 = scmp.eq.s32.totalorder %s25, 0
      %p214 = por %p212, %p213
      %p215 = scmp.ne.s32.totalorder %s201, %s202
      %p216 = scmp.eq.s32.totalorder %s26, 1
      %p217 = por %p215, %p216
      %p219 = scmp.ne.s32.totalorder %s202, %s218
      %p220 = scmp.eq.s32.totalorder %s26, 0
      %p221 = por %p219, %p220
      %s222 = ssub.s32 %s28, %s35
      %p223 = scmp.eq.s32.totalorder %s222, 0
      %s225 = sadd.s32 %s224, 1
      %s226 = scalar_select %p223, %s224, %s225
      %p229 = pneg %p223
      %p230 = scmp.eq.s32.totalorder %s20, 1
      %p231 = por %p229, %p230
      %p232 = scmp.ne.s32.totalorder %s224, %s227
      %p233 = scmp.eq.s32.totalorder %s20, 0
      %p234 = por %p232, %p233
      %p235 = scmp.ne.s32.totalorder %s224, %s227
      %p236 = scmp.eq.s32.totalorder %s25, 1
      %p237 = por %p235, %p236
      %p238 = scmp.ne.s32.totalorder %s227, %s228
      %p239 = scmp.eq.s32.totalorder %s25, 0
      %p240 = por %p238, %p239
      %p241 = scmp.ne.s32.totalorder %s227, %s228
      %p242 = scmp.eq.s32.totalorder %s26, 1
      %p243 = por %p241, %p242
      %p245 = scmp.ne.s32.totalorder %s228, %s244
      %p246 = scmp.eq.s32.totalorder %s26, 0
      %p247 = por %p245, %p246
      %s248 = ssub.s32 %s28, %s35
      %p249 = scmp.eq.s32.totalorder %s248, 0
      %s251 = sadd.s32 %s250, 1
      %s252 = scalar_select %p249, %s250, %s251
      %p255 = pneg %p249
      %p256 = scmp.eq.s32.totalorder %s20, 1
      %p257 = por %p255, %p256
      %p258 = scmp.ne.s32.totalorder %s250, %s253
      %p259 = scmp.eq.s32.totalorder %s20, 0
      %p260 = por %p258, %p259
      %p261 = scmp.ne.s32.totalorder %s250, %s253
      %p262 = scmp.eq.s32.totalorder %s25, 1
      %p263 = por %p261, %p262
      %p264 = scmp.ne.s32.totalorder %s253, %s254
      %p265 = scmp.eq.s32.totalorder %s25, 0
      %p266 = por %p264, %p265
      %p267 = scmp.ne.s32.totalorder %s253, %s254
      %p268 = scmp.eq.s32.totalorder %s26, 1
      %p269 = por %p267, %p268
      %p271 = scmp.ne.s32.totalorder %s254, %s270
      %p272 = scmp.eq.s32.totalorder %s26, 0
      %p273 = por %p271, %p272
      %s274 = ssub.s32 %s28, %s35
      %p275 = scmp.eq.s32.totalorder %s274, 0
      %s277 = sadd.s32 %s276, 1
      %s278 = scalar_select %p275, %s276, %s277
      %p281 = pneg %p275
      %p282 = scmp.eq.s32.totalorder %s20, 1
      %p283 = por %p281, %p282
      %p284 = scmp.ne.s32.totalorder %s276, %s279
      %p285 = scmp.eq.s32.totalorder %s20, 0
      %p286 = por %p284, %p285
      %p287 = scmp.ne.s32.totalorder %s276, %s279
      %p288 = scmp.eq.s32.totalorder %s25, 1
      %p289 = por %p287, %p288
      %p290 = scmp.ne.s32.totalorder %s279, %s280
      %p291 = scmp.eq.s32.totalorder %s25, 0
      %p292 = por %p290, %p291
      %p293 = scmp.ne.s32.totalorder %s279, %s280
      %p294 = scmp.eq.s32.totalorder %s26, 1
      %p295 = por %p293, %p294
      %p297 = scmp.ne.s32.totalorder %s280, %s296
      %p298 = scmp.eq.s32.totalorder %s26, 0
      %p299 = por %p297, %p298
      %s300 = ssub.s32 %s28, %s35
      %p301 = scmp.eq.s32.totalorder %s300, 0
      %s303 = sadd.s32 %s302, 1
      %s304 = scalar_select %p301, %s302, %s303
      %p307 = pneg %p301
      %p308 = scmp.eq.s32.totalorder %s20, 1
      %p309 = por %p307, %p308
      %p310 = scmp.ne.s32.totalorder %s302, %s305
      %p311 = scmp.eq.s32.totalorder %s20, 0
      %p312 = por %p310, %p311
      %p313 = scmp.ne.s32.totalorder %s302, %s305
      %p314 = scmp.eq.s32.totalorder %s25, 1
      %p315 = por %p313, %p314
      %p316 = scmp.ne.s32.totalorder %s305, %s306
      %p317 = scmp.eq.s32.totalorder %s25, 0
      %p318 = por %p316, %p317
      %p319 = scmp.ne.s32.totalorder %s305, %s306
      %p320 = scmp.eq.s32.totalorder %s26, 1
      %p321 = por %p319, %p320
      %p323 = scmp.ne.s32.totalorder %s306, %s322
      %p324 = scmp.eq.s32.totalorder %s26, 0
      %p325 = por %p323, %p324
      %s326 = ssub.s32 %s28, %s35
      %p327 = scmp.eq.s32.totalorder %s326, 0
      %s329 = sadd.s32 %s328, 1
      %s330 = scalar_select %p327, %s328, %s329
      %p333 = pneg %p327
      %p334 = scmp.eq.s32.totalorder %s20, 1
      %p335 = por %p333, %p334
      %p336 = scmp.ne.s32.totalorder %s328, %s331
      %p337 = scmp.eq.s32.totalorder %s20, 0
      %p338 = por %p336, %p337
      %p339 = scmp.ne.s32.totalorder %s328, %s331
      %p340 = scmp.eq.s32.totalorder %s25, 1
      %p341 = por %p339, %p340
      %p342 = scmp.ne.s32.totalorder %s331, %s332
      %p343 = scmp.eq.s32.totalorder %s25, 0
      %p344 = por %p342, %p343
      %p345 = scmp.ne.s32.totalorder %s331, %s332
      %p346 = scmp.eq.s32.totalorder %s26, 1
      %p347 = por %p345, %p346
      %p349 = scmp.ne.s32.totalorder %s332, %s348
      %p350 = scmp.eq.s32.totalorder %s26, 0
      %p351 = por %p349, %p350
      %s352 = ssub.s32 %s28, %s35
      %p353 = scmp.eq.s32.totalorder %s352, 0
      %s355 = sadd.s32 %s354, 1
      %s356 = scalar_select %p353, %s354, %s355
      %p359 = pneg %p353
      %p360 = scmp.eq.s32.totalorder %s20, 1
      %p361 = por %p359, %p360
      %p362 = scmp.ne.s32.totalorder %s354, %s357
      %p363 = scmp.eq.s32.totalorder %s20, 0
      %p364 = por %p362, %p363
      %p365 = scmp.ne.s32.totalorder %s354, %s357
      %p366 = scmp.eq.s32.totalorder %s25, 1
      %p367 = por %p365, %p366
      %p368 = scmp.ne.s32.totalorder %s357, %s358
      %p369 = scmp.eq.s32.totalorder %s25, 0
      %p370 = por %p368, %p369
      %p371 = scmp.ne.s32.totalorder %s357, %s358
      %p372 = scmp.eq.s32.totalorder %s26, 1
      %p373 = por %p371, %p372
      %p375 = scmp.ne.s32.totalorder %s358, %s374
      %p376 = scmp.eq.s32.totalorder %s26, 0
      %p377 = por %p375, %p376
      %s378 = ssub.s32 %s27, %s39
      %p379 = scmp.eq.s32.totalorder %s378, 0
      %s381 = sadd.s32 %s380, 1
      %s382 = scalar_select %p379, %s380, %s381
      %p385 = pneg %p379
      %p386 = scmp.eq.s32.totalorder %s20, 1
      %p387 = por %p385, %p386
      %p388 = scmp.ne.s32.totalorder %s380, %s383
      %p389 = scmp.eq.s32.totalorder %s20, 0
      %p390 = por %p388, %p389
      %p391 = scmp.ne.s32.totalorder %s380, %s383
      %p392 = scmp.eq.s32.totalorder %s25, 1
      %p393 = por %p391, %p392
      %p394 = scmp.ne.s32.totalorder %s383, %s384
      %p395 = scmp.eq.s32.totalorder %s25, 0
      %p396 = por %p394, %p395
      %p397 = scmp.ne.s32.totalorder %s383, %s384
      %p398 = scmp.eq.s32.totalorder %s26, 1
      %p399 = por %p397, %p398
      %p401 = scmp.ne.s32.totalorder %s384, %s400
      %p402 = scmp.eq.s32.totalorder %s26, 0
      %p403 = por %p401, %p402
      %p404 = scmp.le.s32.totalorder 1, %s20
      %p405 = scmp.lt.s32.totalorder %s20, 3
      %p406 = pnand %p404, %p405
      %p407 = pneg %p406
      // Predicated region
      $region9: #{tpu_custom_call.1} parent=5 // pred_check
        _
      $region10: #{tpu_custom_call.1} parent=5 // pred_check_branch
        %409 = sbr.rel (%p406) target = $region12
      $region11: #{tpu_custom_call.1} parent=5 // pred_region
        %s410 = ssub.s32 %s20, 1
        // Predicated region
        $region13: #{tpu_custom_call.1} parent=11 // pred_check
          %p411 = pneg %p58
        $region14: #{tpu_custom_call.1} parent=11 // pred_check_branch
          %413 = sbr.rel (%p411) target = $region16
        $region15: #{tpu_custom_call.1} parent=11 // pred_region
          %s414 = smul.u32 2, %s29
          %p415 = scmp.lt.s32.totalorder %s414, 1
          %s416 = scalar_select %p415, %s414, 1
          %s417 = smul.addr %s416, 8
          %s418 = scalar_lea.vmem %s0, %s417
          %s419 = smul.u32 2, %s29
        $region16: #{tpu_custom_call.1} parent=11 // pred_fallthru
          _
      $region12: #{tpu_custom_call.1} parent=5 // pred_fallthru
        _
      %p420 = scmp.lt.s32.totalorder %s20, 2
      // Predicated region
      $region17: #{tpu_custom_call.1} parent=5 // pred_check
        %p421 = pneg %p420
      $region18: #{tpu_custom_call.1} parent=5 // pred_check_branch
        %423 = sbr.rel (%p421) target = $region20
      $region19: #{tpu_custom_call.1} parent=5 // pred_region
        // Predicated region
        $region21: #{tpu_custom_call.1} parent=19 // pred_check
          %p424 = pneg %p78
        $region22: #{tpu_custom_call.1} parent=19 // pred_check_branch
          %426 = sbr.rel (%p424) target = $region24
        $region23: #{tpu_custom_call.1} parent=19 // pred_region
          %p427 = scmp.lt.s32.totalorder %s28, 1
          %s428 = scalar_select %p427, %s28, 1
          %s429 = scalar_lea.vmem %s1, %s428
        $region24: #{tpu_custom_call.1} parent=19 // pred_fallthru
          _
        // Predicated region
        $region25: #{tpu_custom_call.1} parent=19 // pred_check
          %p430 = pneg %p104
        $region26: #{tpu_custom_call.1} parent=19 // pred_check_branch
          %432 = sbr.rel (%p430) target = $region28
        $region27: #{tpu_custom_call.1} parent=19 // pred_region
          %p433 = scmp.lt.s32.totalorder %s28, 1
          %s434 = scalar_select %p433, %s28, 1
          %s435 = scalar_lea.vmem %s2, %s434
        $region28: #{tpu_custom_call.1} parent=19 // pred_fallthru
          _
        // Predicated region
        $region29: #{tpu_custom_call.1} parent=19 // pred_check
          %p436 = pneg %p130
        $region30: #{tpu_custom_call.1} parent=19 // pred_check_branch
          %438 = sbr.rel (%p436) target = $region32
        $region31: #{tpu_custom_call.1} parent=19 // pred_region
          %p439 = scmp.lt.s32.totalorder %s28, 1
          %s440 = scalar_select %p439, %s28, 1
          %s441 = smul.addr %s440, 4
          %s442 = smul.addr %s441, 4
          %s443 = scalar_lea.vmem %s3, %s442
        $region32: #{tpu_custom_call.1} parent=19 // pred_fallthru
          _
        // Predicated region
        $region33: #{tpu_custom_call.1} parent=19 // pred_check
          %p444 = pneg %p156
        $region34: #{tpu_custom_call.1} parent=19 // pred_check_branch
          %446 = sbr.rel (%p444) target = $region36
        $region35: #{tpu_custom_call.1} parent=19 // pred_region
          %p447 = scmp.lt.s32.totalorder %s28, 1
          %s448 = scalar_select %p447, %s28, 1
          %s449 = scalar_lea.vmem %s4, %s448
        $region36: #{tpu_custom_call.1} parent=19 // pred_fallthru
          _
        // Predicated region
        $region37: #{tpu_custom_call.1} parent=19 // pred_check
          %p450 = pneg %p182
        $region38: #{tpu_custom_call.1} parent=19 // pred_check_branch
          %452 = sbr.rel (%p450) target = $region40
        $region39: #{tpu_custom_call.1} parent=19 // pred_region
          %p453 = scmp.lt.s32.totalorder %s28, 1
          %s454 = scalar_select %p453, %s28, 1
          %s455 = smul.addr %s454, 4
          %s456 = smul.addr %s455, 4
          %s457 = scalar_lea.vmem %s5, %s456
        $region40: #{tpu_custom_call.1} parent=19 // pred_fallthru
          _
        // Predicated region
        $region41: #{tpu_custom_call.1} parent=19 // pred_check
          %p458 = pneg %p208
        $region42: #{tpu_custom_call.1} parent=19 // pred_check_branch
          %460 = sbr.rel (%p458) target = $region44
        $region43: #{tpu_custom_call.1} parent=19 // pred_region
          %p461 = scmp.lt.s32.totalorder %s28, 1
          %s462 = scalar_select %p461, %s28, 1
          %s463 = scalar_lea.vmem %s6, %s462
        $region44: #{tpu_custom_call.1} parent=19 // pred_fallthru
          _
        // Predicated region
        $region45: #{tpu_custom_call.1} parent=19 // pred_check
          %p464 = pneg %p234
        $region46: #{tpu_custom_call.1} parent=19 // pred_check_branch
          %466 = sbr.rel (%p464) target = $region48
        $region47: #{tpu_custom_call.1} parent=19 // pred_region
          %p467 = scmp.lt.s32.totalorder %s28, 1
          %s468 = scalar_select %p467, %s28, 1
          %s469 = scalar_lea.vmem %s7, %s468
        $region48: #{tpu_custom_call.1} parent=19 // pred_fallthru
          _
        // Predicated region
        $region49: #{tpu_custom_call.1} parent=19 // pred_check
          %p470 = pneg %p260
        $region50: #{tpu_custom_call.1} parent=19 // pred_check_branch
          %472 = sbr.rel (%p470) target = $region52
        $region51: #{tpu_custom_call.1} parent=19 // pred_region
          %p473 = scmp.lt.s32.totalorder %s28, 1
          %s474 = scalar_select %p473, %s28, 1
          %s475 = scalar_lea.vmem %s8, %s474
        $region52: #{tpu_custom_call.1} parent=19 // pred_fallthru
          _
        // Predicated region
        $region53: #{tpu_custom_call.1} parent=19 // pred_check
          %p476 = pneg %p286
        $region54: #{tpu_custom_call.1} parent=19 // pred_check_branch
          %478 = sbr.rel (%p476) target = $region56
        $region55: #{tpu_custom_call.1} parent=19 // pred_region
          %p479 = scmp.lt.s32.totalorder %s28, 1
          %s480 = scalar_select %p479, %s28, 1
          %s481 = smul.addr %s480, 4
          %s482 = smul.addr %s481, 4
          %s483 = scalar_lea.vmem %s9, %s482
        $region56: #{tpu_custom_call.1} parent=19 // pred_fallthru
          _
        // Predicated region
        $region57: #{tpu_custom_call.1} parent=19 // pred_check
          %p484 = pneg %p312
        $region58: #{tpu_custom_call.1} parent=19 // pred_check_branch
          %486 = sbr.rel (%p484) target = $region60
        $region59: #{tpu_custom_call.1} parent=19 // pred_region
          %p487 = scmp.lt.s32.totalorder %s28, 1
          %s488 = scalar_select %p487, %s28, 1
          %s489 = scalar_lea.vmem %s10, %s488
        $region60: #{tpu_custom_call.1} parent=19 // pred_fallthru
          _
        // Predicated region
        $region61: #{tpu_custom_call.1} parent=19 // pred_check
          %p490 = pneg %p338
        $region62: #{tpu_custom_call.1} parent=19 // pred_check_branch
          %492 = sbr.rel (%p490) target = $region64
        $region63: #{tpu_custom_call.1} parent=19 // pred_region
          %p493 = scmp.lt.s32.totalorder %s28, 1
          %s494 = scalar_select %p493, %s28, 1
          %s495 = smul.addr %s494, 16
          %s496 = smul.addr %s495, 4
          %s497 = scalar_lea.vmem %s11, %s496
        $region64: #{tpu_custom_call.1} parent=19 // pred_fallthru
          _
        // Predicated region
        $region65: #{tpu_custom_call.1} parent=19 // pred_check
          %p498 = pneg %p364
        $region66: #{tpu_custom_call.1} parent=19 // pred_check_branch
          %500 = sbr.rel (%p498) target = $region68
        $region67: #{tpu_custom_call.1} parent=19 // pred_region
          %p501 = scmp.lt.s32.totalorder %s28, 1
          %s502 = scalar_select %p501, %s28, 1
          %s503 = scalar_lea.vmem %s12, %s502
        $region68: #{tpu_custom_call.1} parent=19 // pred_fallthru
          _
      $region20: #{tpu_custom_call.1} parent=5 // pred_fallthru
        _
      %p504 = scmp.le.s32.totalorder 1, %s20
      %p505 = scmp.lt.s32.totalorder %s20, 3
      %p506 = pnand %p504, %p505
      %p507 = pneg %p506
      // Predicated region
      $region69: #{tpu_custom_call.1} parent=5 // pred_check
        _
      $region70: #{tpu_custom_call.1} parent=5 // pred_check_branch
        %509 = sbr.rel (%p506) target = $region72
      $region71: #{tpu_custom_call.1} parent=5 // pred_region
        %s510 = ssub.s32 %s20, 1
        %s511 = smul.u32 2, %s29
        %p512 = scmp.lt.s32.totalorder %s511, 1
        %s513 = scalar_select %p512, %s511, 1
        %s514 = smul.addr %s513, 8
        %s515 = scalar_lea.vmem %s0, %s514
        %p516 = pneg %p58
        %p517 = pneg %p55
        %p518 = scmp.lt.s32.totalorder %s30, 1
        %s519 = scalar_select %p518, %s30, 1
        %s520 = scalar_lea.vmem %s1, %s519
        %p521 = pneg %p84
        %p522 = pneg %p81
        %p523 = scmp.lt.s32.totalorder %s30, 1
        %s524 = scalar_select %p523, %s30, 1
        %s525 = scalar_lea.vmem %s2, %s524
        %p526 = pneg %p110
        %p527 = pneg %p107
        %p528 = scmp.lt.s32.totalorder %s30, 1
        %s529 = scalar_select %p528, %s30, 1
        %s530 = smul.addr %s529, 4
        %s531 = smul.addr %s530, 4
        %s532 = scalar_lea.vmem %s3, %s531
        %p533 = pneg %p136
        %p534 = pneg %p133
        %p535 = scmp.lt.s32.totalorder %s30, 1
        %s536 = scalar_select %p535, %s30, 1
        %s537 = scalar_lea.vmem %s4, %s536
        %p538 = pneg %p162
        %p539 = pneg %p159
        %p540 = scmp.lt.s32.totalorder %s30, 1
        %s541 = scalar_select %p540, %s30, 1
        %s542 = smul.addr %s541, 4
        %s543 = smul.addr %s542, 4
        %s544 = scalar_lea.vmem %s5, %s543
        %p545 = pneg %p188
        %p546 = pneg %p185
        %p547 = scmp.lt.s32.totalorder %s30, 1
        %s548 = scalar_select %p547, %s30, 1
        %s549 = scalar_lea.vmem %s6, %s548
        %p550 = pneg %p214
        %p551 = pneg %p211
        %p552 = scmp.lt.s32.totalorder %s30, 1
        %s553 = scalar_select %p552, %s30, 1
        %s554 = scalar_lea.vmem %s7, %s553
        %p555 = pneg %p240
        %p556 = pneg %p237
        %p557 = scmp.lt.s32.totalorder %s30, 1
        %s558 = scalar_select %p557, %s30, 1
        %s559 = scalar_lea.vmem %s8, %s558
        %p560 = pneg %p266
        %p561 = pneg %p263
        %p562 = scmp.lt.s32.totalorder %s30, 1
        %s563 = scalar_select %p562, %s30, 1
        %s564 = smul.addr %s563, 4
        %s565 = smul.addr %s564, 4
        %s566 = scalar_lea.vmem %s9, %s565
        %p567 = pneg %p292
        %p568 = pneg %p289
        %p569 = scmp.lt.s32.totalorder %s30, 1
        %s570 = scalar_select %p569, %s30, 1
        %s571 = scalar_lea.vmem %s10, %s570
        %p572 = pneg %p318
        %p573 = pneg %p315
        %p574 = scmp.lt.s32.totalorder %s30, 1
        %s575 = scalar_select %p574, %s30, 1
        %s576 = smul.addr %s575, 16
        %s577 = smul.addr %s576, 4
        %s578 = scalar_lea.vmem %s11, %s577
        %p579 = pneg %p344
        %p580 = pneg %p341
        %p581 = scmp.lt.s32.totalorder %s30, 1
        %s582 = scalar_select %p581, %s30, 1
        %s583 = scalar_lea.vmem %s12, %s582
        %p584 = pneg %p370
        %p585 = pneg %p367
        %p586 = pneg %p396
        %p587 = pneg %p393
        %s588 = smul.u32 2, %s29
        %p589 = scmp.lt.s32.totalorder %s588, 1
        %s590 = scalar_select %p589, %s588, 1
        %s591 = smul.addr %s590, 8
        %s592 = scalar_lea.vmem %s0, %s591
        %s593 = smul.u32 2, %s29
        %p594 = scmp.lt.s32.totalorder %s30, 1
        %s595 = scalar_select %p594, %s30, 1
        %s596 = scalar_lea.vmem %s1, %s595
        %p597 = scmp.lt.s32.totalorder %s30, 1
        %s598 = scalar_select %p597, %s30, 1
        %s599 = scalar_lea.vmem %s2, %s598
        %p600 = scmp.lt.s32.totalorder %s30, 1
        %s601 = scalar_select %p600, %s30, 1
        %s602 = smul.addr %s601, 4
        %s603 = smul.addr %s602, 4
        %s604 = scalar_lea.vmem %s3, %s603
        %p605 = scmp.lt.s32.totalorder %s30, 1
        %s606 = scalar_select %p605, %s30, 1
        %s607 = scalar_lea.vmem %s4, %s606
        %p608 = scmp.lt.s32.totalorder %s30, 1
        %s609 = scalar_select %p608, %s30, 1
        %s610 = smul.addr %s609, 4
        %s611 = smul.addr %s610, 4
        %s612 = scalar_lea.vmem %s5, %s611
        %p613 = scmp.lt.s32.totalorder %s30, 1
        %s614 = scalar_select %p613, %s30, 1
        %s615 = scalar_lea.vmem %s6, %s614
        %p616 = scmp.lt.s32.totalorder %s30, 1
        %s617 = scalar_select %p616, %s30, 1
        %s618 = scalar_lea.vmem %s7, %s617
        %p619 = scmp.lt.s32.totalorder %s30, 1
        %s620 = scalar_select %p619, %s30, 1
        %s621 = scalar_lea.vmem %s8, %s620
        %p622 = scmp.lt.s32.totalorder %s30, 1
        %s623 = scalar_select %p622, %s30, 1
        %s624 = smul.addr %s623, 4
        %s625 = smul.addr %s624, 4
        %s626 = scalar_lea.vmem %s9, %s625
        %p627 = scmp.lt.s32.totalorder %s30, 1
        %s628 = scalar_select %p627, %s30, 1
        %s629 = scalar_lea.vmem %s10, %s628
        %p630 = scmp.lt.s32.totalorder %s30, 1
        %s631 = scalar_select %p630, %s30, 1
        %s632 = smul.addr %s631, 16
        %s633 = smul.addr %s632, 4
        %s634 = scalar_lea.vmem %s11, %s633
        %p635 = scmp.lt.s32.totalorder %s30, 1
        %s636 = scalar_select %p635, %s30, 1
        %s637 = scalar_lea.vmem %s12, %s636
        %s638 = smul.u32 2, %s29
        %p640 = scmp.eq.s32.totalorder %s30, 0
        // Predicated region
        $region73: #{tpu_custom_call.1} parent=71 // pred_check
          %p641 = pneg %p640
        $region74: #{tpu_custom_call.1} parent=71 // pred_check_branch
          %643 = sbr.rel (%p641) target = $region76
        $region75: #{tpu_custom_call.1} parent=71 // pred_region
          %v644 = vld [vmem:[%s592] sm:$0xff]
          %v645 = vld [vmem:[%s592 + $0x8] sm:$0xff]
          %vm646 = vcmask 261120
          %647 = vst.msk [vmem:[#allocation2] sm:$0xff] %vm646, %v644
          %648 = vst.msk [vmem:[#allocation2 + $0x8] sm:$0xff] %vm646, %v645
        $region76: #{tpu_custom_call.1} parent=71 // pred_fallthru
          _
        %v649 = vld [vmem:[#allocation2] sm:$0xff]
        %v650 = vld [vmem:[#allocation2 + $0x8] sm:$0xff]
        %v651 = vld [vmem:[%s596] sm:$0x1]
        %v652 = vld [vmem:[%s599] sm:$0x1]
        %vm653 = vcmask 261120
        %v654 = vsel %vm653, %v649, 0.0
        %655 = vadd.xlane.f32.xlu0 %v654
        %v656 = vpop.xlane.xlu0 %655
        %v657 = vsel %vm653, %v650, 0.0
        %658 = vadd.xlane.f32.xlu0 %v657
        %v659 = vpop.xlane.xlu0 %658
        %v660 = vrcp.pop 32.0
        %v661 = vmul.f32 %v656, %v660
        %v662 = vmul.f32 %v659, %v660
        %v663 = vsub.f32 %v649, %v661
        %v664 = vsub.f32 %v650, %v662
        %v665 = vmul.f32 %v663, %v663
        %v666 = vmul.f32 %v664, %v664
        %v667 = vsel %vm653, %v665, 0.0
        %668 = vadd.xlane.f32.xlu0 %v667
        %v669 = vpop.xlane.xlu0 %668
        %v670 = vsel %vm653, %v666, 0.0
        %671 = vadd.xlane.f32.xlu0 %v670
        %v672 = vpop.xlane.xlu0 %671
        %v673 = vmul.f32 %v669, %v660
        %v674 = vmul.f32 %v672, %v660
        %v675 = vadd.f32 %v673, 1e-05
        %v676 = vadd.f32 %v674, 1e-05
        %v677 = vrsqrt.pop %v675
        %v678 = vrsqrt.pop %v676
        %v679 = vmul.f32 %v663, %v677
        %v680 = vmul.f32 %v664, %v678
        %v682 = vlaneseq
        %v683 = vshrl.u32 %v682, 7
        %v684 = vsub.s32 0, %v683
        %v685 = vrot.slane %v651, %v684
        %v687 = vmul.f32 %v679, %v685
        %v688 = vmul.f32 %v680, %v685
        %v690 = vlaneseq
        %v691 = vshrl.u32 %v690, 7
        %v692 = vsub.s32 0, %v691
        %v693 = vrot.slane %v652, %v692
        %v695 = vadd.f32 %v687, %v693
        %v696 = vadd.f32 %v688, %v693
        %v697 = vpack.c.bf16 %v696, %v695
        %v698 = vld [vmem:[%s604] sm:$0xf]
        %v699 = vld [vmem:[%s604 + $0x4] sm:$0xf]
        %v700 = vld [vmem:[%s604 + $0x8] sm:$0xf]
        %v701 = vld [vmem:[%s604 + $0xc] sm:$0xf]
        %v702 = vld [vmem:[%s607] sm:$0x1]
        %v704 = vlaneseq
        %v705 = vshrl.u32 %v704, 7
        %v706 = vsub.s32 0, %v705
        %v707 = vrot.slane %v702, %v706
        %v713 = vunpack.c.l.b16 %v698
        %v714 = vunpack.c.l.b16 %v699
        %v715 = vunpack.c.l.b16 %v700
        %v716 = vunpack.c.l.b16 %v701
        %v717 = vpack.c.b16 %v714, %v713
        %v718 = vpack.c.b16 %v716, %v715
        %v722 = vsel %vm653, %v697, 0
        %724 = vmatprep.subr.bf16.mxu0 0
        %725 = vmatpush1.bf16.msra.mxu0 %v717
        %726 = vmatprep.subr.bf16.mxu0 0
        %727 = vmatpush1.bf16.msra.mxu0 %v718
        %728 = vmatprep.subr.bf16.mxu0 0
        %729 = vmatpush1.bf16.msra.mxu0 0
        %730 = vmatprep.subr.bf16.mxu0 0
        %731 = vmatpush1.bf16.msra.mxu0 0
        %732 = vmatprep.subr.bf16.mxu0 0
        %733 = vmatpush1.bf16.msra.mxu0 0
        %734 = vmatprep.subr.bf16.mxu0 0
        %735 = vmatpush1.bf16.msra.mxu0 0
        %736 = vmatprep.subr.bf16.mxu0 0
        %737 = vmatpush1.bf16.msra.mxu0 0
        %738 = vmatprep.subr.bf16.mxu0 0
        %739 = vmatpush1.bf16.msra.mxu0 0
        %740 = vmatprep.subr.bf16.mxu0 0
        %741 = vmatpush1.bf16.msra.mxu0 0
        %742 = vmatprep.subr.bf16.mxu0 0
        %743 = vmatpush1.bf16.msra.mxu0 0
        %744 = vmatprep.subr.bf16.mxu0 0
        %745 = vmatpush1.bf16.msra.mxu0 0
        %746 = vmatprep.subr.bf16.mxu0 0
        %747 = vmatpush1.bf16.msra.mxu0 0
        %748 = vmatprep.subr.bf16.mxu0 0
        %749 = vmatpush1.bf16.msra.mxu0 0
        %750 = vmatprep.subr.bf16.mxu0 0
        %751 = vmatpush1.bf16.msra.mxu0 0
        %752 = vmatprep.subr.bf16.mxu0 0
        %753 = vmatpush1.bf16.msra.mxu0 0
        %754 = vmatprep.subr.bf16.mxu0 0
        %755 = vmatpush1.bf16.msra.mxu0 0
        %756 = vmatprep.mubr.bf16.mxu0 0
        %757 = vmatmul.mubr.bf16.gmra.mrb[0].mxu0 %v722
        %v758 = vpop.f32.mrb[0].mxu0
        %v759 = vadd.f32 %v707, %v758
        %v760 = vpop.f32.mrb[0].mxu0
        %v761 = vpop.f32.mrb[0].mxu0
        %v762 = vadd.f32 %v707, %v761
        %v763 = vpop.f32.mrb[0].mxu0
        %764 = vdwg.mxu0
        %v765 = vpack.c.bf16 %v759, %v759
        %v766 = vpack.c.bf16 %v762, %v762
        %v767 = vld [vmem:[%s612] sm:$0xf]
        %v768 = vld [vmem:[%s612 + $0x4] sm:$0xf]
        %v769 = vld [vmem:[%s612 + $0x8] sm:$0xf]
        %v770 = vld [vmem:[%s612 + $0xc] sm:$0xf]
        %772 = vrot.lane.b32.xlu0 %v765, 96
        %v773 = vpop.permute.xlu0 %772
        %vm774 = vcmask 64512
        %v776 = vsel %vm774, %v765, 0
        %v779 = vsel %vm774, %v773, 0
        %781 = vmatprep.subr.bf16.mxu0 0
        %782 = vmatpush1.bf16.xpose.msra.mxu0 %v779
        %783 = vmatprep.subr.bf16.mxu0 0
        %784 = vmatpush1.bf16.xpose.msra.mxu0 0
        %785 = vmatprep.subr.bf16.mxu0 0
        %786 = vmatpush1.bf16.xpose.msra.mxu0 0
        %787 = vmatprep.subr.bf16.mxu0 0
        %788 = vmatpush1.bf16.xpose.msra.mxu0 0
        %789 = vmatprep.subr.bf16.mxu0 0
        %790 = vmatpush1.bf16.xpose.msra.mxu0 0
        %791 = vmatprep.subr.bf16.mxu0 0
        %792 = vmatpush1.bf16.xpose.msra.mxu0 0
        %793 = vmatprep.subr.bf16.mxu0 0
        %794 = vmatpush1.bf16.xpose.msra.mxu0 0
        %795 = vmatprep.subr.bf16.mxu0 0
        %796 = vmatpush1.bf16.xpose.msra.mxu0 0
        %797 = vmatprep.subr.bf16.mxu0 0
        %798 = vmatpush1.bf16.xpose.msra.mxu0 0
        %799 = vmatprep.subr.bf16.mxu0 0
        %800 = vmatpush1.bf16.xpose.msra.mxu0 0
        %801 = vmatprep.subr.bf16.mxu0 0
        %802 = vmatpush1.bf16.xpose.msra.mxu0 0
        %803 = vmatprep.subr.bf16.mxu0 0
        %804 = vmatpush1.bf16.xpose.msra.mxu0 0
        %805 = vmatprep.subr.bf16.mxu0 0
        %806 = vmatpush1.bf16.xpose.msra.mxu0 0
        %807 = vmatprep.subr.bf16.mxu0 0
        %808 = vmatpush1.bf16.xpose.msra.mxu0 0
        %809 = vmatprep.subr.bf16.mxu0 0
        %810 = vmatpush1.bf16.xpose.msra.mxu0 0
        %811 = vmatprep.subr.bf16.mxu0 0
        %812 = vmatpush1.bf16.xpose.msra.mxu0 0
        %813 = vmatprep.mubr.bf16.mxu0 0
        %814 = vmatmul.mubr.bf16.gmra.mrb[0].mxu0 %v776
        %v815 = vpop.f32.mrb[0].mxu0
        %v816 = vadd.f32 0.0, %v815
        %v817 = vpop.f32.mrb[0].mxu0
        %v818 = vpop.f32.mrb[0].mxu0
        %v819 = vpop.f32.mrb[0].mxu0
        %820 = vdwg.mxu0
        %822 = vrot.lane.b32.xlu0 %v766, 96
        %v823 = vpop.permute.xlu0 %822
        %v825 = vsel %vm774, %v766, 0
        %v828 = vsel %vm774, %v823, 0
        %830 = vmatprep.subr.bf16.mxu0 0
        %831 = vmatpush1.bf16.xpose.msra.mxu0 %v828
        %832 = vmatprep.subr.bf16.mxu0 0
        %833 = vmatpush1.bf16.xpose.msra.mxu0 0
        %834 = vmatprep.subr.bf16.mxu0 0
        %835 = vmatpush1.bf16.xpose.msra.mxu0 0
        %836 = vmatprep.subr.bf16.mxu0 0
        %837 = vmatpush1.bf16.xpose.msra.mxu0 0
        %838 = vmatprep.subr.bf16.mxu0 0
        %839 = vmatpush1.bf16.xpose.msra.mxu0 0
        %840 = vmatprep.subr.bf16.mxu0 0
        %841 = vmatpush1.bf16.xpose.msra.mxu0 0
        %842 = vmatprep.subr.bf16.mxu0 0
        %843 = vmatpush1.bf16.xpose.msra.mxu0 0
        %844 = vmatprep.subr.bf16.mxu0 0
        %845 = vmatpush1.bf16.xpose.msra.mxu0 0
        %846 = vmatprep.subr.bf16.mxu0 0
        %847 = vmatpush1.bf16.xpose.msra.mxu0 0
        %848 = vmatprep.subr.bf16.mxu0 0
        %849 = vmatpush1.bf16.xpose.msra.mxu0 0
        %850 = vmatprep.subr.bf16.mxu0 0
        %851 = vmatpush1.bf16.xpose.msra.mxu0 0
        %852 = vmatprep.subr.bf16.mxu0 0
        %853 = vmatpush1.bf16.xpose.msra.mxu0 0
        %854 = vmatprep.subr.bf16.mxu0 0
        %855 = vmatpush1.bf16.xpose.msra.mxu0 0
        %856 = vmatprep.subr.bf16.mxu0 0
        %857 = vmatpush1.bf16.xpose.msra.mxu0 0
        %858 = vmatprep.subr.bf16.mxu0 0
        %859 = vmatpush1.bf16.xpose.msra.mxu0 0
        %860 = vmatprep.subr.bf16.mxu0 0
        %861 = vmatpush1.bf16.xpose.msra.mxu0 0
        %862 = vmatprep.mubr.bf16.mxu0 0
        %863 = vmatmul.mubr.bf16.gmra.mrb[0].mxu0 %v825
        %v864 = vpop.f32.mrb[0].mxu0
        %v865 = vadd.f32 0.0, %v864
        %v866 = vpop.f32.mrb[0].mxu0
        %v867 = vpop.f32.mrb[0].mxu0
        %v868 = vpop.f32.mrb[0].mxu0
        %869 = vdwg.mxu0
        %v870 = vsel %vm774, %v816, -inf
        %871 = vmax.xlane.f32.xlu0 %v870
        %v872 = vpop.xlane.xlu0 %871
        %v873 = vsel %vm774, %v865, -inf
        %874 = vmax.xlane.f32.xlu0 %v873
        %v875 = vpop.xlane.xlu0 %874
        %v876 = vsub.f32 %v816, %v872
        %v877 = vsub.f32 %v865, %v875
        %v878 = vmul.f32 %v876, 1.442695
        %v879 = vpow.pop %v878
        %v880 = vmul.f32 %v877, 1.442695
        %v881 = vpow.pop %v880
        %v882 = vsel %vm774, %v879, 0.0
        %883 = vadd.xlane.f32.xlu0 %v882
        %v884 = vpop.xlane.xlu0 %883
        %v885 = vsel %vm774, %v881, 0.0
        %886 = vadd.xlane.f32.xlu0 %v885
        %v887 = vpop.xlane.xlu0 %886
        %v888 = vrcp.pop %v884
        %v889 = vrcp.pop %v887
        %v890 = vmul.f32 %v879, %v888
        %v891 = vmul.f32 %v881, %v889
        %v892 = vpack.c.bf16 %v890, %v890
        %v893 = vpack.c.bf16 %v891, %v891
        %894 = vrot.lane.b32.xlu0 %v765, 64
        %v895 = vpop.permute.xlu0 %894
        %v897 = vsel %vm774, %v892, 0
        %vm899 = vcmask 1043456
        %v901 = vsel %vm899, %v895, 0
        %903 = vmatprep.subr.bf16.mxu0 0
        %904 = vmatpush1.bf16.msra.mxu0 %v901
        %905 = vmatprep.subr.bf16.mxu0 0
        %906 = vmatpush1.bf16.msra.mxu0 0
        %907 = vmatprep.subr.bf16.mxu0 0
        %908 = vmatpush1.bf16.msra.mxu0 0
        %909 = vmatprep.subr.bf16.mxu0 0
        %910 = vmatpush1.bf16.msra.mxu0 0
        %911 = vmatprep.subr.bf16.mxu0 0
        %912 = vmatpush1.bf16.msra.mxu0 0
        %913 = vmatprep.subr.bf16.mxu0 0
        %914 = vmatpush1.bf16.msra.mxu0 0
        %915 = vmatprep.subr.bf16.mxu0 0
        %916 = vmatpush1.bf16.msra.mxu0 0
        %917 = vmatprep.subr.bf16.mxu0 0
        %918 = vmatpush1.bf16.msra.mxu0 0
        %919 = vmatprep.subr.bf16.mxu0 0
        %920 = vmatpush1.bf16.msra.mxu0 0
        %921 = vmatprep.subr.bf16.mxu0 0
        %922 = vmatpush1.bf16.msra.mxu0 0
        %923 = vmatprep.subr.bf16.mxu0 0
        %924 = vmatpush1.bf16.msra.mxu0 0
        %925 = vmatprep.subr.bf16.mxu0 0
        %926 = vmatpush1.bf16.msra.mxu0 0
        %927 = vmatprep.subr.bf16.mxu0 0
        %928 = vmatpush1.bf16.msra.mxu0 0
        %929 = vmatprep.subr.bf16.mxu0 0
        %930 = vmatpush1.bf16.msra.mxu0 0
        %931 = vmatprep.subr.bf16.mxu0 0
        %932 = vmatpush1.bf16.msra.mxu0 0
        %933 = vmatprep.subr.bf16.mxu0 0
        %934 = vmatpush1.bf16.msra.mxu0 0
        %935 = vmatprep.mubr.bf16.mxu0 0
        %936 = vmatmul.mubr.bf16.gmra.mrb[0].mxu0 %v897
        %v937 = vpop.f32.mrb[0].mxu0
        %v938 = vadd.f32 0.0, %v937
        %v939 = vpop.f32.mrb[0].mxu0
        %v940 = vpop.f32.mrb[0].mxu0
        %v941 = vpop.f32.mrb[0].mxu0
        %942 = vdwg.mxu0
        %943 = vrot.lane.b32.xlu0 %v766, 64
        %v944 = vpop.permute.xlu0 %943
        %v946 = vsel %vm774, %v893, 0
        %v949 = vsel %vm899, %v944, 0
        %951 = vmatprep.subr.bf16.mxu0 0
        %952 = vmatpush1.bf16.msra.mxu0 %v949
        %953 = vmatprep.subr.bf16.mxu0 0
        %954 = vmatpush1.bf16.msra.mxu0 0
        %955 = vmatprep.subr.bf16.mxu0 0
        %956 = vmatpush1.bf16.msra.mxu0 0
        %957 = vmatprep.subr.bf16.mxu0 0
        %958 = vmatpush1.bf16.msra.mxu0 0
        %959 = vmatprep.subr.bf16.mxu0 0
        %960 = vmatpush1.bf16.msra.mxu0 0
        %961 = vmatprep.subr.bf16.mxu0 0
        %962 = vmatpush1.bf16.msra.mxu0 0
        %963 = vmatprep.subr.bf16.mxu0 0
        %964 = vmatpush1.bf16.msra.mxu0 0
        %965 = vmatprep.subr.bf16.mxu0 0
        %966 = vmatpush1.bf16.msra.mxu0 0
        %967 = vmatprep.subr.bf16.mxu0 0
        %968 = vmatpush1.bf16.msra.mxu0 0
        %969 = vmatprep.subr.bf16.mxu0 0
        %970 = vmatpush1.bf16.msra.mxu0 0
        %971 = vmatprep.subr.bf16.mxu0 0
        %972 = vmatpush1.bf16.msra.mxu0 0
        %973 = vmatprep.subr.bf16.mxu0 0
        %974 = vmatpush1.bf16.msra.mxu0 0
        %975 = vmatprep.subr.bf16.mxu0 0
        %976 = vmatpush1.bf16.msra.mxu0 0
        %977 = vmatprep.subr.bf16.mxu0 0
        %978 = vmatpush1.bf16.msra.mxu0 0
        %979 = vmatprep.subr.bf16.mxu0 0
        %980 = vmatpush1.bf16.msra.mxu0 0
        %981 = vmatprep.subr.bf16.mxu0 0
        %982 = vmatpush1.bf16.msra.mxu0 0
        %983 = vmatprep.mubr.bf16.mxu0 0
        %984 = vmatmul.mubr.bf16.gmra.mrb[0].mxu0 %v946
        %v985 = vpop.f32.mrb[0].mxu0
        %v986 = vadd.f32 0.0, %v985
        %v987 = vpop.f32.mrb[0].mxu0
        %v988 = vpop.f32.mrb[0].mxu0
        %v989 = vpop.f32.mrb[0].mxu0
        %990 = vdwg.mxu0
        %v991 = vpack.c.bf16 %v986, %v938
        %992 = vrot.lane.b32.xlu0 %v765, 120
        %v993 = vpop.permute.xlu0 %992
        %994 = vrot.lane.b32.xlu0 %v765, 88
        %v995 = vpop.permute.xlu0 %994
        %v997 = vsel %vm774, %v993, 0
        %v1000 = vsel %vm774, %v995, 0
        %1002 = vmatprep.subr.bf16.mxu0 0
        %1003 = vmatpush1.bf16.xpose.msra.mxu0 %v1000
        %1004 = vmatprep.subr.bf16.mxu0 0
        %1005 = vmatpush1.bf16.xpose.msra.mxu0 0
        %1006 = vmatprep.subr.bf16.mxu0 0
        %1007 = vmatpush1.bf16.xpose.msra.mxu0 0
        %1008 = vmatprep.subr.bf16.mxu0 0
        %1009 = vmatpush1.bf16.xpose.msra.mxu0 0
        %1010 = vmatprep.subr.bf16.mxu0 0
        %1011 = vmatpush1.bf16.xpose.msra.mxu0 0
        %1012 = vmatprep.subr.bf16.mxu0 0
        %1013 = vmatpush1.bf16.xpose.msra.mxu0 0
        %1014 = vmatprep.subr.bf16.mxu0 0
        %1015 = vmatpush1.bf16.xpose.msra.mxu0 0
        %1016 = vmatprep.subr.bf16.mxu0 0
        %1017 = vmatpush1.bf16.xpose.msra.mxu0 0
        %1018 = vmatprep.subr.bf16.mxu0 0
        %1019 = vmatpush1.bf16.xpose.msra.mxu0 0
        %1020 = vmatprep.subr.bf16.mxu0 0
        %1021 = vmatpush1.bf16.xpose.msra.mxu0 0
        %1022 = vmatprep.subr.bf16.mxu0 0
        %1023 = vmatpush1.bf16.xpose.msra.mxu0 0
        %1024 = vmatprep.subr.bf16.mxu0 0
        %1025 = vmatpush1.bf16.xpose.msra.mxu0 0
        %1026 = vmatprep.subr.bf16.mxu0 0
        %1027 = vmatpush1.bf16.xpose.msra.mxu0 0
        %1028 = vmatprep.subr.bf16.mxu0 0
        %1029 = vmatpush1.bf16.xpose.msra.mxu0 0
        %1030 = vmatprep.subr.bf16.mxu0 0
        %1031 = vmatpush1.bf16.xpose.msra.mxu0 0
        %1032 = vmatprep.subr.bf16.mxu0 0
        %1033 = vmatpush1.bf16.xpose.msra.mxu0 0
        %1034 = vmatprep.mubr.bf16.mxu0 0
        %1035 = vmatmul.mubr.bf16.gmra.mrb[0].mxu0 %v997
        %v1036 = vpop.f32.mrb[0].mxu0
        %v1037 = vadd.f32 0.0, %v1036
        %v1038 = vpop.f32.mrb[0].mxu0
        %v1039 = vpop.f32.mrb[0].mxu0
        %v1040 = vpop.f32.mrb[0].mxu0
        %1041 = vdwg.mxu0
        %1042 = vrot.lane.b32.xlu0 %v766, 120
        %v1043 = vpop.permute.xlu0 %1042
        %1044 = vrot.lane.b32.xlu0 %v766, 88
        %v1045 = vpop.permute.xlu0 %1044
        %v1047 = vsel %vm774, %v1043, 0
        %v1050 = vsel %vm774, %v1045, 0
        %1052 = vmatprep.subr.bf16.mxu0 0
        %1053 = vmatpush1.bf16.xpose.msra.mxu0 %v1050
        %1054 = vmatprep.subr.bf16.mxu0 0
        %1055 = vmatpush1.bf16.xpose.msra.mxu0 0
        %1056 = vmatprep.subr.bf16.mxu0 0
        %1057 = vmatpush1.bf16.xpose.msra.mxu0 0
        %1058 = vmatprep.subr.bf16.mxu0 0
        %1059 = vmatpush1.bf16.xpose.msra.mxu0 0
        %1060 = vmatprep.subr.bf16.mxu0 0
        %1061 = vmatpush1.bf16.xpose.msra.mxu0 0
        %1062 = vmatprep.subr.bf16.mxu0 0
        %1063 = vmatpush1.bf16.xpose.msra.mxu0 0
        %1064 = vmatprep.subr.bf16.mxu0 0
        %1065 = vmatpush1.bf16.xpose.msra.mxu0 0
        %1066 = vmatprep.subr.bf16.mxu0 0
        %1067 = vmatpush1.bf16.xpose.msra.mxu0 0
        %1068 = vmatprep.subr.bf16.mxu0 0
        %1069 = vmatpush1.bf16.xpose.msra.mxu0 0
        %1070 = vmatprep.subr.bf16.mxu0 0
        %1071 = vmatpush1.bf16.xpose.msra.mxu0 0
        %1072 = vmatprep.subr.bf16.mxu0 0
        %1073 = vmatpush1.bf16.xpose.msra.mxu0 0
        %1074 = vmatprep.subr.bf16.mxu0 0
        %1075 = vmatpush1.bf16.xpose.msra.mxu0 0
        %1076 = vmatprep.subr.bf16.mxu0 0
        %1077 = vmatpush1.bf16.xpose.msra.mxu0 0
        %1078 = vmatprep.subr.bf16.mxu0 0
        %1079 = vmatpush1.bf16.xpose.msra.mxu0 0
        %1080 = vmatprep.subr.bf16.mxu0 0
        %1081 = vmatpush1.bf16.xpose.msra.mxu0 0
        %1082 = vmatprep.subr.bf16.mxu0 0
        %1083 = vmatpush1.bf16.xpose.msra.mxu0 0
        %1084 = vmatprep.mubr.bf16.mxu0 0
        %1085 = vmatmul.mubr.bf16.gmra.mrb[0].mxu0 %v1047
        %v1086 = vpop.f32.mrb[0].mxu0
        %v1087 = vadd.f32 0.0, %v1086
        %v1088 = vpop.f32.mrb[0].mxu0
        %v1089 = vpop.f32.mrb[0].mxu0
        %v1090 = vpop.f32.mrb[0].mxu0
        %1091 = vdwg.mxu0
        %v1092 = vsel %vm774, %v1037, -inf
        %1093 = vmax.xlane.f32.xlu0 %v1092
        %v1094 = vpop.xlane.xlu0 %1093
        %v1095 = vsel %vm774, %v1087, -inf
        %1096 = vmax.xlane.f32.xlu0 %v1095
        %v1097 = vpop.xlane.xlu0 %1096
        %v1098 = vsub.f32 %v1037, %v1094
        %v1099 = vsub.f32 %v1087, %v1097
        %v1100 = vmul.f32 %v1098, 1.442695
        %v1101 = vpow.pop %v1100
        %v1102 = vmul.f32 %v1099, 1.442695
        %v1103 = vpow.pop %v1102
        %v1104 = vsel %vm774, %v1101, 0.0
        %1105 = vadd.xlane.f32.xlu0 %v1104
        %v1106 = vpop.xlane.xlu0 %1105
        %v1107 = vsel %vm774, %v1103, 0.0
        %1108 = vadd.xlane.f32.xlu0 %v1107
        %v1109 = vpop.xlane.xlu0 %1108
        %v1110 = vrcp.pop %v1106
        %v1111 = vrcp.pop %v1109
        %v1112 = vmul.f32 %v1101, %v1110
        %v1113 = vmul.f32 %v1103, %v1111
        %v1114 = vpack.c.bf16 %v1112, %v1112
        %v1115 = vpack.c.bf16 %v1113, %v1113
        %1116 = vrot.lane.b32.xlu0 %v765, 56
        %v1117 = vpop.permute.xlu0 %1116
        %v1119 = vsel %vm774, %v1114, 0
        %v1122 = vsel %vm899, %v1117, 0
        %1124 = vmatprep.subr.bf16.mxu0 0
        %1125 = vmatpush1.bf16.msra.mxu0 %v1122
        %1126 = vmatprep.subr.bf16.mxu0 0
        %1127 = vmatpush1.bf16.msra.mxu0 0
        %1128 = vmatprep.subr.bf16.mxu0 0
        %1129 = vmatpush1.bf16.msra.mxu0 0
        %1130 = vmatprep.subr.bf16.mxu0 0
        %1131 = vmatpush1.bf16.msra.mxu0 0
        %1132 = vmatprep.subr.bf16.mxu0 0
        %1133 = vmatpush1.bf16.msra.mxu0 0
        %1134 = vmatprep.subr.bf16.mxu0 0
        %1135 = vmatpush1.bf16.msra.mxu0 0
        %1136 = vmatprep.subr.bf16.mxu0 0
        %1137 = vmatpush1.bf16.msra.mxu0 0
        %1138 = vmatprep.subr.bf16.mxu0 0
        %1139 = vmatpush1.bf16.msra.mxu0 0
        %1140 = vmatprep.subr.bf16.mxu0 0
        %1141 = vmatpush1.bf16.msra.mxu0 0
        %1142 = vmatprep.subr.bf16.mxu0 0
        %1143 = vmatpush1.bf16.msra.mxu0 0
        %1144 = vmatprep.subr.bf16.mxu0 0
        %1145 = vmatpush1.bf16.msra.mxu0 0
        %1146 = vmatprep.subr.bf16.mxu0 0
        %1147 = vmatpush1.bf16.msra.mxu0 0
        %1148 = vmatprep.subr.bf16.mxu0 0
        %1149 = vmatpush1.bf16.msra.mxu0 0
        %1150 = vmatprep.subr.bf16.mxu0 0
        %1151 = vmatpush1.bf16.msra.mxu0 0
        %1152 = vmatprep.subr.bf16.mxu0 0
        %1153 = vmatpush1.bf16.msra.mxu0 0
        %1154 = vmatprep.subr.bf16.mxu0 0
        %1155 = vmatpush1.bf16.msra.mxu0 0
        %1156 = vmatprep.mubr.bf16.mxu0 0
        %1157 = vmatmul.mubr.bf16.gmra.mrb[0].mxu0 %v1119
        %v1158 = vpop.f32.mrb[0].mxu0
        %v1159 = vadd.f32 0.0, %v1158
        %v1160 = vpop.f32.mrb[0].mxu0
        %v1161 = vpop.f32.mrb[0].mxu0
        %v1162 = vpop.f32.mrb[0].mxu0
        %1163 = vdwg.mxu0
        %1164 = vrot.lane.b32.xlu0 %v766, 56
        %v1165 = vpop.permute.xlu0 %1164
        %v1167 = vsel %vm774, %v1115, 0
        %v1170 = vsel %vm899, %v1165, 0
        %1172 = vmatprep.subr.bf16.mxu0 0
        %1173 = vmatpush1.bf16.msra.mxu0 %v1170
        %1174 = vmatprep.subr.bf16.mxu0 0
        %1175 = vmatpush1.bf16.msra.mxu0 0
        %1176 = vmatprep.subr.bf16.mxu0 0
        %1177 = vmatpush1.bf16.msra.mxu0 0
        %1178 = vmatprep.subr.bf16.mxu0 0
        %1179 = vmatpush1.bf16.msra.mxu0 0
        %1180 = vmatprep.subr.bf16.mxu0 0
        %1181 = vmatpush1.bf16.msra.mxu0 0
        %1182 = vmatprep.subr.bf16.mxu0 0
        %1183 = vmatpush1.bf16.msra.mxu0 0
        %1184 = vmatprep.subr.bf16.mxu0 0
        %1185 = vmatpush1.bf16.msra.mxu0 0
        %1186 = vmatprep.subr.bf16.mxu0 0
        %1187 = vmatpush1.bf16.msra.mxu0 0
        %1188 = vmatprep.subr.bf16.mxu0 0
        %1189 = vmatpush1.bf16.msra.mxu0 0
        %1190 = vmatprep.subr.bf16.mxu0 0
        %1191 = vmatpush1.bf16.msra.mxu0 0
        %1192 = vmatprep.subr.bf16.mxu0 0
        %1193 = vmatpush1.bf16.msra.mxu0 0
        %1194 = vmatprep.subr.bf16.mxu0 0
        %1195 = vmatpush1.bf16.msra.mxu0 0
        %1196 = vmatprep.subr.bf16.mxu0 0
        %1197 = vmatpush1.bf16.msra.mxu0 0
        %1198 = vmatprep.subr.bf16.mxu0 0
        %1199 = vmatpush1.bf16.msra.mxu0 0
        %1200 = vmatprep.subr.bf16.mxu0 0
        %1201 = vmatpush1.bf16.msra.mxu0 0
        %1202 = vmatprep.subr.bf16.mxu0 0
        %1203 = vmatpush1.bf16.msra.mxu0 0
        %1204 = vmatprep.mubr.bf16.mxu0 0
        %1205 = vmatmul.mubr.bf16.gmra.mrb[0].mxu0 %v1167
        %v1206 = vpop.f32.mrb[0].mxu0
        %v1207 = vadd.f32 0.0, %v1206
        %v1208 = vpop.f32.mrb[0].mxu0
        %v1209 = vpop.f32.mrb[0].mxu0
        %v1210 = vpop.f32.mrb[0].mxu0
        %1211 = vdwg.mxu0
        %v1212 = vpack.c.bf16 %v1207, %v1159
        %v1214 = vsel %vm774, %v1212, 0
        %v1217 = vsel %vm899, %v768, 0
        %1219 = vmatprep.subr.bf16.mxu0 0
        %1220 = vmatpush1.bf16.msra.mxu0 %v1217
        %1221 = vmatprep.subr.bf16.mxu0 0
        %1222 = vmatpush1.bf16.msra.mxu0 0
        %1223 = vmatprep.subr.bf16.mxu0 0
        %1224 = vmatpush1.bf16.msra.mxu0 0
        %1225 = vmatprep.subr.bf16.mxu0 0
        %1226 = vmatpush1.bf16.msra.mxu0 0
        %1227 = vmatprep.subr.bf16.mxu0 0
        %1228 = vmatpush1.bf16.msra.mxu0 0
        %1229 = vmatprep.subr.bf16.mxu0 0
        %1230 = vmatpush1.bf16.msra.mxu0 0
        %1231 = vmatprep.subr.bf16.mxu0 0
        %1232 = vmatpush1.bf16.msra.mxu0 0
        %1233 = vmatprep.subr.bf16.mxu0 0
        %1234 = vmatpush1.bf16.msra.mxu0 0
        %1235 = vmatprep.subr.bf16.mxu0 0
        %1236 = vmatpush1.bf16.msra.mxu0 0
        %1237 = vmatprep.subr.bf16.mxu0 0
        %1238 = vmatpush1.bf16.msra.mxu0 0
        %1239 = vmatprep.subr.bf16.mxu0 0
        %1240 = vmatpush1.bf16.msra.mxu0 0
        %1241 = vmatprep.subr.bf16.mxu0 0
        %1242 = vmatpush1.bf16.msra.mxu0 0
        %1243 = vmatprep.subr.bf16.mxu0 0
        %1244 = vmatpush1.bf16.msra.mxu0 0
        %1245 = vmatprep.subr.bf16.mxu0 0
        %1246 = vmatpush1.bf16.msra.mxu0 0
        %1247 = vmatprep.subr.bf16.mxu0 0
        %1248 = vmatpush1.bf16.msra.mxu0 0
        %1249 = vmatprep.subr.bf16.mxu0 0
        %1250 = vmatpush1.bf16.msra.mxu0 0
        %1251 = vmatprep.mubr.bf16.mxu0 0
        %1252 = vmatmul.mubr.bf16.gmra.mrb[0].mxu0 %v1214
        %v1253 = vpop.f32.mrb[0].mxu0
        %v1254 = vadd.f32 0.0, %v1253
        %v1255 = vpop.f32.mrb[0].mxu0
        %v1256 = vpop.f32.mrb[0].mxu0
        %v1257 = vadd.f32 0.0, %v1256
        %v1258 = vpop.f32.mrb[0].mxu0
        %1259 = vdwg.mxu0
        %v1261 = vsel %vm774, %v991, 0
        %v1264 = vsel %vm899, %v767, 0
        %1266 = vmatprep.subr.bf16.mxu0 0
        %1267 = vmatpush1.bf16.msra.mxu0 %v1264
        %1268 = vmatprep.subr.bf16.mxu0 0
        %1269 = vmatpush1.bf16.msra.mxu0 0
        %1270 = vmatprep.subr.bf16.mxu0 0
        %1271 = vmatpush1.bf16.msra.mxu0 0
        %1272 = vmatprep.subr.bf16.mxu0 0
        %1273 = vmatpush1.bf16.msra.mxu0 0
        %1274 = vmatprep.subr.bf16.mxu0 0
        %1275 = vmatpush1.bf16.msra.mxu0 0
        %1276 = vmatprep.subr.bf16.mxu0 0
        %1277 = vmatpush1.bf16.msra.mxu0 0
        %1278 = vmatprep.subr.bf16.mxu0 0
        %1279 = vmatpush1.bf16.msra.mxu0 0
        %1280 = vmatprep.subr.bf16.mxu0 0
        %1281 = vmatpush1.bf16.msra.mxu0 0
        %1282 = vmatprep.subr.bf16.mxu0 0
        %1283 = vmatpush1.bf16.msra.mxu0 0
        %1284 = vmatprep.subr.bf16.mxu0 0
        %1285 = vmatpush1.bf16.msra.mxu0 0
        %1286 = vmatprep.subr.bf16.mxu0 0
        %1287 = vmatpush1.bf16.msra.mxu0 0
        %1288 = vmatprep.subr.bf16.mxu0 0
        %1289 = vmatpush1.bf16.msra.mxu0 0
        %1290 = vmatprep.subr.bf16.mxu0 0
        %1291 = vmatpush1.bf16.msra.mxu0 0
        %1292 = vmatprep.subr.bf16.mxu0 0
        %1293 = vmatpush1.bf16.msra.mxu0 0
        %1294 = vmatprep.subr.bf16.mxu0 0
        %1295 = vmatpush1.bf16.msra.mxu0 0
        %1296 = vmatprep.subr.bf16.mxu0 0
        %1297 = vmatpush1.bf16.msra.mxu0 0
        %1298 = vmatprep.mubr.bf16.mxu0 0
        %1299 = vmatmul.mubr.bf16.gmra.mrb[0].mxu0 %v1261
        %v1300 = vpop.f32.mrb[0].mxu0
        %v1301 = vadd.f32 %v1254, %v1300
        %v1302 = vpop.f32.mrb[0].mxu0
        %v1303 = vpop.f32.mrb[0].mxu0
        %v1304 = vadd.f32 %v1257, %v1303
        %v1305 = vpop.f32.mrb[0].mxu0
        %1306 = vdwg.mxu0
        %1307 = vrot.lane.b32.xlu0 %v765, 112
        %v1308 = vpop.permute.xlu0 %1307
        %1309 = vrot.lane.b32.xlu0 %v765, 80
        %v1310 = vpop.permute.xlu0 %1309
        %v1312 = vsel %vm774, %v1308, 0
        %v1315 = vsel %vm774, %v1310, 0
        %1317 = vmatprep.subr.bf16.mxu0 0
        %1318 = vmatpush1.bf16.xpose.msra.mxu0 %v1315
        %1319 = vmatprep.subr.bf16.mxu0 0
        %1320 = vmatpush1.bf16.xpose.msra.mxu0 0
        %1321 = vmatprep.subr.bf16.mxu0 0
        %1322 = vmatpush1.bf16.xpose.msra.mxu0 0
        %1323 = vmatprep.subr.bf16.mxu0 0
        %1324 = vmatpush1.bf16.xpose.msra.mxu0 0
        %1325 = vmatprep.subr.bf16.mxu0 0
        %1326 = vmatpush1.bf16.xpose.msra.mxu0 0
        %1327 = vmatprep.subr.bf16.mxu0 0
        %1328 = vmatpush1.bf16.xpose.msra.mxu0 0
        %1329 = vmatprep.subr.bf16.mxu0 0
        %1330 = vmatpush1.bf16.xpose.msra.mxu0 0
        %1331 = vmatprep.subr.bf16.mxu0 0
        %1332 = vmatpush1.bf16.xpose.msra.mxu0 0
        %1333 = vmatprep.subr.bf16.mxu0 0
        %1334 = vmatpush1.bf16.xpose.msra.mxu0 0
        %1335 = vmatprep.subr.bf16.mxu0 0
        %1336 = vmatpush1.bf16.xpose.msra.mxu0 0
        %1337 = vmatprep.subr.bf16.mxu0 0
        %1338 = vmatpush1.bf16.xpose.msra.mxu0 0
        %1339 = vmatprep.subr.bf16.mxu0 0
        %1340 = vmatpush1.bf16.xpose.msra.mxu0 0
        %1341 = vmatprep.subr.bf16.mxu0 0
        %1342 = vmatpush1.bf16.xpose.msra.mxu0 0
        %1343 = vmatprep.subr.bf16.mxu0 0
        %1344 = vmatpush1.bf16.xpose.msra.mxu0 0
        %1345 = vmatprep.subr.bf16.mxu0 0
        %1346 = vmatpush1.bf16.xpose.msra.mxu0 0
        %1347 = vmatprep.subr.bf16.mxu0 0
        %1348 = vmatpush1.bf16.xpose.msra.mxu0 0
        %1349 = vmatprep.mubr.bf16.mxu0 0
        %1350 = vmatmul.mubr.bf16.gmra.mrb[0].mxu0 %v1312
        %v1351 = vpop.f32.mrb[0].mxu0
        %v1352 = vadd.f32 0.0, %v1351
        %v1353 = vpop.f32.mrb[0].mxu0
        %v1354 = vpop.f32.mrb[0].mxu0
        %v1355 = vpop.f32.mrb[0].mxu0
        %1356 = vdwg.mxu0
        %1357 = vrot.lane.b32.xlu0 %v766, 112
        %v1358 = vpop.permute.xlu0 %1357
        %1359 = vrot.lane.b32.xlu0 %v766, 80
        %v1360 = vpop.permute.xlu0 %1359
        %v1362 = vsel %vm774, %v1358, 0
        %v1365 = vsel %vm774, %v1360, 0
        %1367 = vmatprep.subr.bf16.mxu0 0
        %1368 = vmatpush1.bf16.xpose.msra.mxu0 %v1365
        %1369 = vmatprep.subr.bf16.mxu0 0
        %1370 = vmatpush1.bf16.xpose.msra.mxu0 0
        %1371 = vmatprep.subr.bf16.mxu0 0
        %1372 = vmatpush1.bf16.xpose.msra.mxu0 0
        %1373 = vmatprep.subr.bf16.mxu0 0
        %1374 = vmatpush1.bf16.xpose.msra.mxu0 0
        %1375 = vmatprep.subr.bf16.mxu0 0
        %1376 = vmatpush1.bf16.xpose.msra.mxu0 0
        %1377 = vmatprep.subr.bf16.mxu0 0
        %1378 = vmatpush1.bf16.xpose.msra.mxu0 0
        %1379 = vmatprep.subr.bf16.mxu0 0
        %1380 = vmatpush1.bf16.xpose.msra.mxu0 0
        %1381 = vmatprep.subr.bf16.mxu0 0
        %1382 = vmatpush1.bf16.xpose.msra.mxu0 0
        %1383 = vmatprep.subr.bf16.mxu0 0
        %1384 = vmatpush1.bf16.xpose.msra.mxu0 0
        %1385 = vmatprep.subr.bf16.mxu0 0
        %1386 = vmatpush1.bf16.xpose.msra.mxu0 0
        %1387 = vmatprep.subr.bf16.mxu0 0
        %1388 = vmatpush1.bf16.xpose.msra.mxu0 0
        %1389 = vmatprep.subr.bf16.mxu0 0
        %1390 = vmatpush1.bf16.xpose.msra.mxu0 0
        %1391 = vmatprep.subr.bf16.mxu0 0
        %1392 = vmatpush1.bf16.xpose.msra.mxu0 0
        %1393 = vmatprep.subr.bf16.mxu0 0
        %1394 = vmatpush1.bf16.xpose.msra.mxu0 0
        %1395 = vmatprep.subr.bf16.mxu0 0
        %1396 = vmatpush1.bf16.xpose.msra.mxu0 0
        %1397 = vmatprep.subr.bf16.mxu0 0
        %1398 = vmatpush1.bf16.xpose.msra.mxu0 0
        %1399 = vmatprep.mubr.bf16.mxu0 0
        %1400 = vmatmul.mubr.bf16.gmra.mrb[0].mxu0 %v1362
        %v1401 = vpop.f32.mrb[0].mxu0
        %v1402 = vadd.f32 0.0, %v1401
        %v1403 = vpop.f32.mrb[0].mxu0
        %v1404 = vpop.f32.mrb[0].mxu0
        %v1405 = vpop.f32.mrb[0].mxu0
        %1406 = vdwg.mxu0
        %v1407 = vsel %vm774, %v1352, -inf
        %1408 = vmax.xlane.f32.xlu0 %v1407
        %v1409 = vpop.xlane.xlu0 %1408
        %v1410 = vsel %vm774, %v1402, -inf
        %1411 = vmax.xlane.f32.xlu0 %v1410
        %v1412 = vpop.xlane.xlu0 %1411
        %v1413 = vsub.f32 %v1352, %v1409
        %v1414 = vsub.f32 %v1402, %v1412
        %v1415 = vmul.f32 %v1413, 1.442695
        %v1416 = vpow.pop %v1415
        %v1417 = vmul.f32 %v1414, 1.442695
        %v1418 = vpow.pop %v1417
        %v1419 = vsel %vm774, %v1416, 0.0
        %1420 = vadd.xlane.f32.xlu0 %v1419
        %v1421 = vpop.xlane.xlu0 %1420
        %v1422 = vsel %vm774, %v1418, 0.0
        %1423 = vadd.xlane.f32.xlu0 %v1422
        %v1424 = vpop.xlane.xlu0 %1423
        %v1425 = vrcp.pop %v1421
        %v1426 = vrcp.pop %v1424
        %v1427 = vmul.f32 %v1416, %v1425
        %v1428 = vmul.f32 %v1418, %v1426
        %v1429 = vpack.c.bf16 %v1427, %v1427
        %v1430 = vpack.c.bf16 %v1428, %v1428
        %1431 = vrot.lane.b32.xlu0 %v765, 48
        %v1432 = vpop.permute.xlu0 %1431
        %v1434 = vsel %vm774, %v1429, 0
        %v1437 = vsel %vm899, %v1432, 0
        %1439 = vmatprep.subr.bf16.mxu0 0
        %1440 = vmatpush1.bf16.msra.mxu0 %v1437
        %1441 = vmatprep.subr.bf16.mxu0 0
        %1442 = vmatpush1.bf16.msra.mxu0 0
        %1443 = vmatprep.subr.bf16.mxu0 0
        %1444 = vmatpush1.bf16.msra.mxu0 0
        %1445 = vmatprep.subr.bf16.mxu0 0
        %1446 = vmatpush1.bf16.msra.mxu0 0
        %1447 = vmatprep.subr.bf16.mxu0 0
        %1448 = vmatpush1.bf16.msra.mxu0 0
        %1449 = vmatprep.subr.bf16.mxu0 0
        %1450 = vmatpush1.bf16.msra.mxu0 0
        %1451 = vmatprep.subr.bf16.mxu0 0
        %1452 = vmatpush1.bf16.msra.mxu0 0
        %1453 = vmatprep.subr.bf16.mxu0 0
        %1454 = vmatpush1.bf16.msra.mxu0 0
        %1455 = vmatprep.subr.bf16.mxu0 0
        %1456 = vmatpush1.bf16.msra.mxu0 0
        %1457 = vmatprep.subr.bf16.mxu0 0
        %1458 = vmatpush1.bf16.msra.mxu0 0
        %1459 = vmatprep.subr.bf16.mxu0 0
        %1460 = vmatpush1.bf16.msra.mxu0 0
        %1461 = vmatprep.subr.bf16.mxu0 0
        %1462 = vmatpush1.bf16.msra.mxu0 0
        %1463 = vmatprep.subr.bf16.mxu0 0
        %1464 = vmatpush1.bf16.msra.mxu0 0
        %1465 = vmatprep.subr.bf16.mxu0 0
        %1466 = vmatpush1.bf16.msra.mxu0 0
        %1467 = vmatprep.subr.bf16.mxu0 0
        %1468 = vmatpush1.bf16.msra.mxu0 0
        %1469 = vmatprep.subr.bf16.mxu0 0
        %1470 = vmatpush1.bf16.msra.mxu0 0
        %1471 = vmatprep.mubr.bf16.mxu0 0
        %1472 = vmatmul.mubr.bf16.gmra.mrb[0].mxu0 %v1434
        %v1473 = vpop.f32.mrb[0].mxu0
        %v1474 = vadd.f32 0.0, %v1473
        %v1475 = vpop.f32.mrb[0].mxu0
        %v1476 = vpop.f32.mrb[0].mxu0
        %v1477 = vpop.f32.mrb[0].mxu0
        %1478 = vdwg.mxu0
        %1479 = vrot.lane.b32.xlu0 %v766, 48
        %v1480 = vpop.permute.xlu0 %1479
        %v1482 = vsel %vm774, %v1430, 0
        %v1485 = vsel %vm899, %v1480, 0
        %1487 = vmatprep.subr.bf16.mxu0 0
        %1488 = vmatpush1.bf16.msra.mxu0 %v1485
        %1489 = vmatprep.subr.bf16.mxu0 0
        %1490 = vmatpush1.bf16.msra.mxu0 0
        %1491 = vmatprep.subr.bf16.mxu0 0
        %1492 = vmatpush1.bf16.msra.mxu0 0
        %1493 = vmatprep.subr.bf16.mxu0 0
        %1494 = vmatpush1.bf16.msra.mxu0 0
        %1495 = vmatprep.subr.bf16.mxu0 0
        %1496 = vmatpush1.bf16.msra.mxu0 0
        %1497 = vmatprep.subr.bf16.mxu0 0
        %1498 = vmatpush1.bf16.msra.mxu0 0
        %1499 = vmatprep.subr.bf16.mxu0 0
        %1500 = vmatpush1.bf16.msra.mxu0 0
        %1501 = vmatprep.subr.bf16.mxu0 0
        %1502 = vmatpush1.bf16.msra.mxu0 0
        %1503 = vmatprep.subr.bf16.mxu0 0
        %1504 = vmatpush1.bf16.msra.mxu0 0
        %1505 = vmatprep.subr.bf16.mxu0 0
        %1506 = vmatpush1.bf16.msra.mxu0 0
        %1507 = vmatprep.subr.bf16.mxu0 0
        %1508 = vmatpush1.bf16.msra.mxu0 0
        %1509 = vmatprep.subr.bf16.mxu0 0
        %1510 = vmatpush1.bf16.msra.mxu0 0
        %1511 = vmatprep.subr.bf16.mxu0 0
        %1512 = vmatpush1.bf16.msra.mxu0 0
        %1513 = vmatprep.subr.bf16.mxu0 0
        %1514 = vmatpush1.bf16.msra.mxu0 0
        %1515 = vmatprep.subr.bf16.mxu0 0
        %1516 = vmatpush1.bf16.msra.mxu0 0
        %1517 = vmatprep.subr.bf16.mxu0 0
        %1518 = vmatpush1.bf16.msra.mxu0 0
        %1519 = vmatprep.mubr.bf16.mxu0 0
        %1520 = vmatmul.mubr.bf16.gmra.mrb[0].mxu0 %v1482
        %v1521 = vpop.f32.mrb[0].mxu0
        %v1522 = vadd.f32 0.0, %v1521
        %v1523 = vpop.f32.mrb[0].mxu0
        %v1524 = vpop.f32.mrb[0].mxu0
        %v1525 = vpop.f32.mrb[0].mxu0
        %1526 = vdwg.mxu0
        %v1527 = vpack.c.bf16 %v1522, %v1474
        %v1529 = vsel %vm774, %v1527, 0
        %v1532 = vsel %vm899, %v769, 0
        %1534 = vmatprep.subr.bf16.mxu0 0
        %1535 = vmatpush1.bf16.msra.mxu0 %v1532
        %1536 = vmatprep.subr.bf16.mxu0 0
        %1537 = vmatpush1.bf16.msra.mxu0 0
        %1538 = vmatprep.subr.bf16.mxu0 0
        %1539 = vmatpush1.bf16.msra.mxu0 0
        %1540 = vmatprep.subr.bf16.mxu0 0
        %1541 = vmatpush1.bf16.msra.mxu0 0
        %1542 = vmatprep.subr.bf16.mxu0 0
        %1543 = vmatpush1.bf16.msra.mxu0 0
        %1544 = vmatprep.subr.bf16.mxu0 0
        %1545 = vmatpush1.bf16.msra.mxu0 0
        %1546 = vmatprep.subr.bf16.mxu0 0
        %1547 = vmatpush1.bf16.msra.mxu0 0
        %1548 = vmatprep.subr.bf16.mxu0 0
        %1549 = vmatpush1.bf16.msra.mxu0 0
        %1550 = vmatprep.subr.bf16.mxu0 0
        %1551 = vmatpush1.bf16.msra.mxu0 0
        %1552 = vmatprep.subr.bf16.mxu0 0
        %1553 = vmatpush1.bf16.msra.mxu0 0
        %1554 = vmatprep.subr.bf16.mxu0 0
        %1555 = vmatpush1.bf16.msra.mxu0 0
        %1556 = vmatprep.subr.bf16.mxu0 0
        %1557 = vmatpush1.bf16.msra.mxu0 0
        %1558 = vmatprep.subr.bf16.mxu0 0
        %1559 = vmatpush1.bf16.msra.mxu0 0
        %1560 = vmatprep.subr.bf16.mxu0 0
        %1561 = vmatpush1.bf16.msra.mxu0 0
        %1562 = vmatprep.subr.bf16.mxu0 0
        %1563 = vmatpush1.bf16.msra.mxu0 0
        %1564 = vmatprep.subr.bf16.mxu0 0
        %1565 = vmatpush1.bf16.msra.mxu0 0
        %1566 = vmatprep.mubr.bf16.mxu0 0
        %1567 = vmatmul.mubr.bf16.gmra.mrb[0].mxu0 %v1529
        %v1568 = vpop.f32.mrb[0].mxu0
        %v1569 = vadd.f32 0.0, %v1568
        %v1570 = vpop.f32.mrb[0].mxu0
        %v1571 = vpop.f32.mrb[0].mxu0
        %v1572 = vadd.f32 0.0, %v1571
        %v1573 = vpop.f32.mrb[0].mxu0
        %1574 = vdwg.mxu0
        %v1575 = vadd.f32 %v1301, %v1569
        %v1576 = vadd.f32 %v1304, %v1572
        %1577 = vrot.lane.b32.xlu0 %v765, 104
        %v1578 = vpop.permute.xlu0 %1577
        %1579 = vrot.lane.b32.xlu0 %v765, 72
        %v1580 = vpop.permute.xlu0 %1579
        %v1582 = vsel %vm774, %v1578, 0
        %v1585 = vsel %vm774, %v1580, 0
        %1587 = vmatprep.subr.bf16.mxu0 0
        %1588 = vmatpush1.bf16.xpose.msra.mxu0 %v1585
        %1589 = vmatprep.subr.bf16.mxu0 0
        %1590 = vmatpush1.bf16.xpose.msra.mxu0 0
        %1591 = vmatprep.subr.bf16.mxu0 0
        %1592 = vmatpush1.bf16.xpose.msra.mxu0 0
        %1593 = vmatprep.subr.bf16.mxu0 0
        %1594 = vmatpush1.bf16.xpose.msra.mxu0 0
        %1595 = vmatprep.subr.bf16.mxu0 0
        %1596 = vmatpush1.bf16.xpose.msra.mxu0 0
        %1597 = vmatprep.subr.bf16.mxu0 0
        %1598 = vmatpush1.bf16.xpose.msra.mxu0 0
        %1599 = vmatprep.subr.bf16.mxu0 0
        %1600 = vmatpush1.bf16.xpose.msra.mxu0 0
        %1601 = vmatprep.subr.bf16.mxu0 0
        %1602 = vmatpush1.bf16.xpose.msra.mxu0 0
        %1603 = vmatprep.subr.bf16.mxu0 0
        %1604 = vmatpush1.bf16.xpose.msra.mxu0 0
        %1605 = vmatprep.subr.bf16.mxu0 0
        %1606 = vmatpush1.bf16.xpose.msra.mxu0 0
        %1607 = vmatprep.subr.bf16.mxu0 0
        %1608 = vmatpush1.bf16.xpose.msra.mxu0 0
        %1609 = vmatprep.subr.bf16.mxu0 0
        %1610 = vmatpush1.bf16.xpose.msra.mxu0 0
        %1611 = vmatprep.subr.bf16.mxu0 0
        %1612 = vmatpush1.bf16.xpose.msra.mxu0 0
        %1613 = vmatprep.subr.bf16.mxu0 0
        %1614 = vmatpush1.bf16.xpose.msra.mxu0 0
        %1615 = vmatprep.subr.bf16.mxu0 0
        %1616 = vmatpush1.bf16.xpose.msra.mxu0 0
        %1617 = vmatprep.subr.bf16.mxu0 0
        %1618 = vmatpush1.bf16.xpose.msra.mxu0 0
        %1619 = vmatprep.mubr.bf16.mxu0 0
        %1620 = vmatmul.mubr.bf16.gmra.mrb[0].mxu0 %v1582
        %v1621 = vpop.f32.mrb[0].mxu0
        %v1622 = vadd.f32 0.0, %v1621
        %v1623 = vpop.f32.mrb[0].mxu0
        %v1624 = vpop.f32.mrb[0].mxu0
        %v1625 = vpop.f32.mrb[0].mxu0
        %1626 = vdwg.mxu0
        %1627 = vrot.lane.b32.xlu0 %v766, 104
        %v1628 = vpop.permute.xlu0 %1627
        %1629 = vrot.lane.b32.xlu0 %v766, 72
        %v1630 = vpop.permute.xlu0 %1629
        %v1632 = vsel %vm774, %v1628, 0
        %v1635 = vsel %vm774, %v1630, 0
        %1637 = vmatprep.subr.bf16.mxu0 0
        %1638 = vmatpush1.bf16.xpose.msra.mxu0 %v1635
        %1639 = vmatprep.subr.bf16.mxu0 0
        %1640 = vmatpush1.bf16.xpose.msra.mxu0 0
        %1641 = vmatprep.subr.bf16.mxu0 0
        %1642 = vmatpush1.bf16.xpose.msra.mxu0 0
        %1643 = vmatprep.subr.bf16.mxu0 0
        %1644 = vmatpush1.bf16.xpose.msra.mxu0 0
        %1645 = vmatprep.subr.bf16.mxu0 0
        %1646 = vmatpush1.bf16.xpose.msra.mxu0 0
        %1647 = vmatprep.subr.bf16.mxu0 0
        %1648 = vmatpush1.bf16.xpose.msra.mxu0 0
        %1649 = vmatprep.subr.bf16.mxu0 0
        %1650 = vmatpush1.bf16.xpose.msra.mxu0 0
        %1651 = vmatprep.subr.bf16.mxu0 0
        %1652 = vmatpush1.bf16.xpose.msra.mxu0 0
        %1653 = vmatprep.subr.bf16.mxu0 0
        %1654 = vmatpush1.bf16.xpose.msra.mxu0 0
        %1655 = vmatprep.subr.bf16.mxu0 0
        %1656 = vmatpush1.bf16.xpose.msra.mxu0 0
        %1657 = vmatprep.subr.bf16.mxu0 0
        %1658 = vmatpush1.bf16.xpose.msra.mxu0 0
        %1659 = vmatprep.subr.bf16.mxu0 0
        %1660 = vmatpush1.bf16.xpose.msra.mxu0 0
        %1661 = vmatprep.subr.bf16.mxu0 0
        %1662 = vmatpush1.bf16.xpose.msra.mxu0 0
        %1663 = vmatprep.subr.bf16.mxu0 0
        %1664 = vmatpush1.bf16.xpose.msra.mxu0 0
        %1665 = vmatprep.subr.bf16.mxu0 0
        %1666 = vmatpush1.bf16.xpose.msra.mxu0 0
        %1667 = vmatprep.subr.bf16.mxu0 0
        %1668 = vmatpush1.bf16.xpose.msra.mxu0 0
        %1669 = vmatprep.mubr.bf16.mxu0 0
        %1670 = vmatmul.mubr.bf16.gmra.mrb[0].mxu0 %v1632
        %v1671 = vpop.f32.mrb[0].mxu0
        %v1672 = vadd.f32 0.0, %v1671
        %v1673 = vpop.f32.mrb[0].mxu0
        %v1674 = vpop.f32.mrb[0].mxu0
        %v1675 = vpop.f32.mrb[0].mxu0
        %1676 = vdwg.mxu0
        %v1677 = vsel %vm774, %v1622, -inf
        %1678 = vmax.xlane.f32.xlu0 %v1677
        %v1679 = vpop.xlane.xlu0 %1678
        %v1680 = vsel %vm774, %v1672, -inf
        %1681 = vmax.xlane.f32.xlu0 %v1680
        %v1682 = vpop.xlane.xlu0 %1681
        %v1683 = vsub.f32 %v1622, %v1679
        %v1684 = vsub.f32 %v1672, %v1682
        %v1685 = vmul.f32 %v1683, 1.442695
        %v1686 = vpow.pop %v1685
        %v1687 = vmul.f32 %v1684, 1.442695
        %v1688 = vpow.pop %v1687
        %v1689 = vsel %vm774, %v1686, 0.0
        %1690 = vadd.xlane.f32.xlu0 %v1689
        %v1691 = vpop.xlane.xlu0 %1690
        %v1692 = vsel %vm774, %v1688, 0.0
        %1693 = vadd.xlane.f32.xlu0 %v1692
        %v1694 = vpop.xlane.xlu0 %1693
        %v1695 = vrcp.pop %v1691
        %v1696 = vrcp.pop %v1694
        %v1697 = vmul.f32 %v1686, %v1695
        %v1698 = vmul.f32 %v1688, %v1696
        %v1699 = vpack.c.bf16 %v1697, %v1697
        %v1700 = vpack.c.bf16 %v1698, %v1698
        %1701 = vrot.lane.b32.xlu0 %v765, 40
        %v1702 = vpop.permute.xlu0 %1701
        %v1704 = vsel %vm774, %v1699, 0
        %v1707 = vsel %vm899, %v1702, 0
        %1709 = vmatprep.subr.bf16.mxu0 0
        %1710 = vmatpush1.bf16.msra.mxu0 %v1707
        %1711 = vmatprep.subr.bf16.mxu0 0
        %1712 = vmatpush1.bf16.msra.mxu0 0
        %1713 = vmatprep.subr.bf16.mxu0 0
        %1714 = vmatpush1.bf16.msra.mxu0 0
        %1715 = vmatprep.subr.bf16.mxu0 0
        %1716 = vmatpush1.bf16.msra.mxu0 0
        %1717 = vmatprep.subr.bf16.mxu0 0
        %1718 = vmatpush1.bf16.msra.mxu0 0
        %1719 = vmatprep.subr.bf16.mxu0 0
        %1720 = vmatpush1.bf16.msra.mxu0 0
        %1721 = vmatprep.subr.bf16.mxu0 0
        %1722 = vmatpush1.bf16.msra.mxu0 0
        %1723 = vmatprep.subr.bf16.mxu0 0
        %1724 = vmatpush1.bf16.msra.mxu0 0
        %1725 = vmatprep.subr.bf16.mxu0 0
        %1726 = vmatpush1.bf16.msra.mxu0 0
        %1727 = vmatprep.subr.bf16.mxu0 0
        %1728 = vmatpush1.bf16.msra.mxu0 0
        %1729 = vmatprep.subr.bf16.mxu0 0
        %1730 = vmatpush1.bf16.msra.mxu0 0
        %1731 = vmatprep.subr.bf16.mxu0 0
        %1732 = vmatpush1.bf16.msra.mxu0 0
        %1733 = vmatprep.subr.bf16.mxu0 0
        %1734 = vmatpush1.bf16.msra.mxu0 0
        %1735 = vmatprep.subr.bf16.mxu0 0
        %1736 = vmatpush1.bf16.msra.mxu0 0
        %1737 = vmatprep.subr.bf16.mxu0 0
        %1738 = vmatpush1.bf16.msra.mxu0 0
        %1739 = vmatprep.subr.bf16.mxu0 0
        %1740 = vmatpush1.bf16.msra.mxu0 0
        %1741 = vmatprep.mubr.bf16.mxu0 0
        %1742 = vmatmul.mubr.bf16.gmra.mrb[0].mxu0 %v1704
        %v1743 = vpop.f32.mrb[0].mxu0
        %v1744 = vadd.f32 0.0, %v1743
        %v1745 = vpop.f32.mrb[0].mxu0
        %v1746 = vpop.f32.mrb[0].mxu0
        %v1747 = vpop.f32.mrb[0].mxu0
        %1748 = vdwg.mxu0
        %1749 = vrot.lane.b32.xlu0 %v766, 40
        %v1750 = vpop.permute.xlu0 %1749
        %v1752 = vsel %vm774, %v1700, 0
        %v1755 = vsel %vm899, %v1750, 0
        %1757 = vmatprep.subr.bf16.mxu0 0
        %1758 = vmatpush1.bf16.msra.mxu0 %v1755
        %1759 = vmatprep.subr.bf16.mxu0 0
        %1760 = vmatpush1.bf16.msra.mxu0 0
        %1761 = vmatprep.subr.bf16.mxu0 0
        %1762 = vmatpush1.bf16.msra.mxu0 0
        %1763 = vmatprep.subr.bf16.mxu0 0
        %1764 = vmatpush1.bf16.msra.mxu0 0
        %1765 = vmatprep.subr.bf16.mxu0 0
        %1766 = vmatpush1.bf16.msra.mxu0 0
        %1767 = vmatprep.subr.bf16.mxu0 0
        %1768 = vmatpush1.bf16.msra.mxu0 0
        %1769 = vmatprep.subr.bf16.mxu0 0
        %1770 = vmatpush1.bf16.msra.mxu0 0
        %1771 = vmatprep.subr.bf16.mxu0 0
        %1772 = vmatpush1.bf16.msra.mxu0 0
        %1773 = vmatprep.subr.bf16.mxu0 0
        %1774 = vmatpush1.bf16.msra.mxu0 0
        %1775 = vmatprep.subr.bf16.mxu0 0
        %1776 = vmatpush1.bf16.msra.mxu0 0
        %1777 = vmatprep.subr.bf16.mxu0 0
        %1778 = vmatpush1.bf16.msra.mxu0 0
        %1779 = vmatprep.subr.bf16.mxu0 0
        %1780 = vmatpush1.bf16.msra.mxu0 0
        %1781 = vmatprep.subr.bf16.mxu0 0
        %1782 = vmatpush1.bf16.msra.mxu0 0
        %1783 = vmatprep.subr.bf16.mxu0 0
        %1784 = vmatpush1.bf16.msra.mxu0 0
        %1785 = vmatprep.subr.bf16.mxu0 0
        %1786 = vmatpush1.bf16.msra.mxu0 0
        %1787 = vmatprep.subr.bf16.mxu0 0
        %1788 = vmatpush1.bf16.msra.mxu0 0
        %1789 = vmatprep.mubr.bf16.mxu0 0
        %1790 = vmatmul.mubr.bf16.gmra.mrb[0].mxu0 %v1752
        %v1791 = vpop.f32.mrb[0].mxu0
        %v1792 = vadd.f32 0.0, %v1791
        %v1793 = vpop.f32.mrb[0].mxu0
        %v1794 = vpop.f32.mrb[0].mxu0
        %v1795 = vpop.f32.mrb[0].mxu0
        %1796 = vdwg.mxu0
        %v1797 = vpack.c.bf16 %v1792, %v1744
        %v1799 = vsel %vm774, %v1797, 0
        %v1802 = vsel %vm899, %v770, 0
        %1804 = vmatprep.subr.bf16.mxu0 0
        %1805 = vmatpush1.bf16.msra.mxu0 %v1802
        %1806 = vmatprep.subr.bf16.mxu0 0
        %1807 = vmatpush1.bf16.msra.mxu0 0
        %1808 = vmatprep.subr.bf16.mxu0 0
        %1809 = vmatpush1.bf16.msra.mxu0 0
        %1810 = vmatprep.subr.bf16.mxu0 0
        %1811 = vmatpush1.bf16.msra.mxu0 0
        %1812 = vmatprep.subr.bf16.mxu0 0
        %1813 = vmatpush1.bf16.msra.mxu0 0
        %1814 = vmatprep.subr.bf16.mxu0 0
        %1815 = vmatpush1.bf16.msra.mxu0 0
        %1816 = vmatprep.subr.bf16.mxu0 0
        %1817 = vmatpush1.bf16.msra.mxu0 0
        %1818 = vmatprep.subr.bf16.mxu0 0
        %1819 = vmatpush1.bf16.msra.mxu0 0
        %1820 = vmatprep.subr.bf16.mxu0 0
        %1821 = vmatpush1.bf16.msra.mxu0 0
        %1822 = vmatprep.subr.bf16.mxu0 0
        %1823 = vmatpush1.bf16.msra.mxu0 0
        %1824 = vmatprep.subr.bf16.mxu0 0
        %1825 = vmatpush1.bf16.msra.mxu0 0
        %1826 = vmatprep.subr.bf16.mxu0 0
        %1827 = vmatpush1.bf16.msra.mxu0 0
        %1828 = vmatprep.subr.bf16.mxu0 0
        %1829 = vmatpush1.bf16.msra.mxu0 0
        %1830 = vmatprep.subr.bf16.mxu0 0
        %1831 = vmatpush1.bf16.msra.mxu0 0
        %1832 = vmatprep.subr.bf16.mxu0 0
        %1833 = vmatpush1.bf16.msra.mxu0 0
        %1834 = vmatprep.subr.bf16.mxu0 0
        %1835 = vmatpush1.bf16.msra.mxu0 0
        %1836 = vmatprep.mubr.bf16.mxu0 0
        %1837 = vmatmul.mubr.bf16.gmra.mrb[0].mxu0 %v1799
        %v1838 = vpop.f32.mrb[0].mxu0
        %v1839 = vadd.f32 0.0, %v1838
        %v1840 = vpop.f32.mrb[0].mxu0
        %v1841 = vpop.f32.mrb[0].mxu0
        %v1842 = vadd.f32 0.0, %v1841
        %v1843 = vpop.f32.mrb[0].mxu0
        %1844 = vdwg.mxu0
        %v1845 = vadd.f32 %v1575, %v1839
        %v1846 = vadd.f32 %v1576, %v1842
        %v1847 = vadd.f32 %v649, %v1845
        %v1848 = vadd.f32 %v650, %v1846
        %v1849 = vld [vmem:[%s615] sm:$0x1]
        %v1851 = vlaneseq
        %v1852 = vshrl.u32 %v1851, 7
        %v1853 = vsub.s32 0, %v1852
        %v1854 = vrot.slane %v1849, %v1853
        %v1856 = vadd.f32 %v1847, %v1854
        %v1857 = vadd.f32 %v1848, %v1854
        %v1858 = vld [vmem:[%s618] sm:$0x1]
        %v1859 = vld [vmem:[%s621] sm:$0x1]
        %v1860 = vsel %vm653, %v1856, 0.0
        %1861 = vadd.xlane.f32.xlu0 %v1860
        %v1862 = vpop.xlane.xlu0 %1861
        %v1863 = vsel %vm653, %v1857, 0.0
        %1864 = vadd.xlane.f32.xlu0 %v1863
        %v1865 = vpop.xlane.xlu0 %1864
        %v1866 = vmul.f32 %v1862, %v660
        %v1867 = vmul.f32 %v1865, %v660
        %v1868 = vsub.f32 %v1856, %v1866
        %v1869 = vsub.f32 %v1857, %v1867
        %v1870 = vmul.f32 %v1868, %v1868
        %v1871 = vmul.f32 %v1869, %v1869
        %v1872 = vsel %vm653, %v1870, 0.0
        %1873 = vadd.xlane.f32.xlu0 %v1872
        %v1874 = vpop.xlane.xlu0 %1873
        %v1875 = vsel %vm653, %v1871, 0.0
        %1876 = vadd.xlane.f32.xlu0 %v1875
        %v1877 = vpop.xlane.xlu0 %1876
        %v1878 = vmul.f32 %v1874, %v660
        %v1879 = vmul.f32 %v1877, %v660
        %v1880 = vadd.f32 %v1878, 1e-05
        %v1881 = vadd.f32 %v1879, 1e-05
        %v1882 = vrsqrt.pop %v1880
        %v1883 = vrsqrt.pop %v1881
        %v1884 = vmul.f32 %v1868, %v1882
        %v1885 = vmul.f32 %v1869, %v1883
        %v1887 = vlaneseq
        %v1888 = vshrl.u32 %v1887, 7
        %v1889 = vsub.s32 0, %v1888
        %v1890 = vrot.slane %v1858, %v1889
        %v1892 = vmul.f32 %v1884, %v1890
        %v1893 = vmul.f32 %v1885, %v1890
        %v1895 = vlaneseq
        %v1896 = vshrl.u32 %v1895, 7
        %v1897 = vsub.s32 0, %v1896
        %v1898 = vrot.slane %v1859, %v1897
        %v1900 = vadd.f32 %v1892, %v1898
        %v1901 = vadd.f32 %v1893, %v1898
        %v1902 = vpack.c.bf16 %v1901, %v1900
        %v1903 = vld [vmem:[%s626] sm:$0xf]
        %v1904 = vld [vmem:[%s626 + $0x4] sm:$0xf]
        %v1905 = vld [vmem:[%s626 + $0x8] sm:$0xf]
        %v1906 = vld [vmem:[%s626 + $0xc] sm:$0xf]
        %v1907 = vld [vmem:[%s629] sm:$0x1]
        %v1909 = vlaneseq
        %v1910 = vshrl.u32 %v1909, 7
        %v1911 = vsub.s32 0, %v1910
        %v1912 = vrot.slane %v1907, %v1911
        %v1918 = vunpack.c.l.b16 %v1903
        %v1919 = vunpack.c.l.b16 %v1904
        %v1920 = vunpack.c.l.b16 %v1905
        %v1921 = vunpack.c.l.b16 %v1906
        %v1922 = vpack.c.b16 %v1919, %v1918
        %v1923 = vpack.c.b16 %v1921, %v1920
        %v1927 = vsel %vm653, %v1902, 0
        %1929 = vmatprep.subr.bf16.mxu0 0
        %1930 = vmatpush1.bf16.msra.mxu0 %v1922
        %1931 = vmatprep.subr.bf16.mxu0 0
        %1932 = vmatpush1.bf16.msra.mxu0 %v1923
        %1933 = vmatprep.subr.bf16.mxu0 0
        %1934 = vmatpush1.bf16.msra.mxu0 0
        %1935 = vmatprep.subr.bf16.mxu0 0
        %1936 = vmatpush1.bf16.msra.mxu0 0
        %1937 = vmatprep.subr.bf16.mxu0 0
        %1938 = vmatpush1.bf16.msra.mxu0 0
        %1939 = vmatprep.subr.bf16.mxu0 0
        %1940 = vmatpush1.bf16.msra.mxu0 0
        %1941 = vmatprep.subr.bf16.mxu0 0
        %1942 = vmatpush1.bf16.msra.mxu0 0
        %1943 = vmatprep.subr.bf16.mxu0 0
        %1944 = vmatpush1.bf16.msra.mxu0 0
        %1945 = vmatprep.subr.bf16.mxu0 0
        %1946 = vmatpush1.bf16.msra.mxu0 0
        %1947 = vmatprep.subr.bf16.mxu0 0
        %1948 = vmatpush1.bf16.msra.mxu0 0
        %1949 = vmatprep.subr.bf16.mxu0 0
        %1950 = vmatpush1.bf16.msra.mxu0 0
        %1951 = vmatprep.subr.bf16.mxu0 0
        %1952 = vmatpush1.bf16.msra.mxu0 0
        %1953 = vmatprep.subr.bf16.mxu0 0
        %1954 = vmatpush1.bf16.msra.mxu0 0
        %1955 = vmatprep.subr.bf16.mxu0 0
        %1956 = vmatpush1.bf16.msra.mxu0 0
        %1957 = vmatprep.subr.bf16.mxu0 0
        %1958 = vmatpush1.bf16.msra.mxu0 0
        %1959 = vmatprep.subr.bf16.mxu0 0
        %1960 = vmatpush1.bf16.msra.mxu0 0
        %1961 = vmatprep.mubr.bf16.mxu0 0
        %1962 = vmatmul.mubr.bf16.gmra.mrb[0].mxu0 %v1927
        %v1963 = vpop.f32.mrb[0].mxu0
        %v1964 = vadd.f32 %v1912, %v1963
        %v1965 = vpop.f32.mrb[0].mxu0
        %v1966 = vpop.f32.mrb[0].mxu0
        %v1967 = vadd.f32 %v1912, %v1966
        %v1968 = vpop.f32.mrb[0].mxu0
        %1969 = vdwg.mxu0
        %v1970 = vmul.f32 %v1964, 1.702
        %v1971 = vmul.f32 %v1967, 1.702
        %v1972 = vxor.u32 %v1970, 2147483648
        %v1973 = vxor.u32 %v1971, 2147483648
        %v1974 = vmul.f32 %v1972, 1.442695
        %v1975 = vpow.pop %v1974
        %v1976 = vmul.f32 %v1973, 1.442695
        %v1977 = vpow.pop %v1976
        %v1978 = vadd.f32 %v1975, 1.0
        %v1979 = vadd.f32 %v1977, 1.0
        %v1980 = vrcp.pop %v1978
        %v1981 = vmul.f32 1.0, %v1980
        %v1982 = vrcp.pop %v1979
        %v1983 = vmul.f32 1.0, %v1982
        %v1984 = vmul.f32 %v1964, %v1981
        %v1985 = vmul.f32 %v1967, %v1983
        %v1986 = vpack.c.bf16 %v1985, %v1984
        %v1987 = vld [vmem:[%s634] sm:$0xf]
        %v1988 = vld [vmem:[%s634 + $0x4] sm:$0xf]
        %v1989 = vld [vmem:[%s634 + $0x8] sm:$0xf]
        %v1990 = vld [vmem:[%s634 + $0xc] sm:$0xf]
        %v1991 = vld [vmem:[%s634 + $0x10] sm:$0xf]
        %v1992 = vld [vmem:[%s634 + $0x14] sm:$0xf]
        %v1993 = vld [vmem:[%s634 + $0x18] sm:$0xf]
        %v1994 = vld [vmem:[%s634 + $0x1c] sm:$0xf]
        %v1995 = vld [vmem:[%s634 + $0x20] sm:$0xf]
        %v1996 = vld [vmem:[%s634 + $0x24] sm:$0xf]
        %v1997 = vld [vmem:[%s634 + $0x28] sm:$0xf]
        %v1998 = vld [vmem:[%s634 + $0x2c] sm:$0xf]
        %v1999 = vld [vmem:[%s634 + $0x30] sm:$0xf]
        %v2000 = vld [vmem:[%s634 + $0x34] sm:$0xf]
        %v2001 = vld [vmem:[%s634 + $0x38] sm:$0xf]
        %v2002 = vld [vmem:[%s634 + $0x3c] sm:$0xf]
        %v2019 = vunpack.c.l.b16 %v1987
        %v2020 = vunpack.c.l.b16 %v1988
        %v2021 = vunpack.c.l.b16 %v1989
        %v2022 = vunpack.c.l.b16 %v1990
        %v2023 = vunpack.c.l.b16 %v1991
        %v2024 = vunpack.c.l.b16 %v1992
        %v2025 = vunpack.c.l.b16 %v1993
        %v2026 = vunpack.c.l.b16 %v1994
        %v2027 = vunpack.c.l.b16 %v1995
        %v2028 = vunpack.c.l.b16 %v1996
        %v2029 = vunpack.c.l.b16 %v1997
        %v2030 = vunpack.c.l.b16 %v1998
        %v2031 = vunpack.c.l.b16 %v1999
        %v2032 = vunpack.c.l.b16 %v2000
        %v2033 = vunpack.c.l.b16 %v2001
        %v2034 = vunpack.c.l.b16 %v2002
        %v2035 = vpack.c.b16 %v2020, %v2019
        %v2036 = vpack.c.b16 %v2022, %v2021
        %v2037 = vpack.c.b16 %v2024, %v2023
        %v2038 = vpack.c.b16 %v2026, %v2025
        %v2039 = vpack.c.b16 %v2028, %v2027
        %v2040 = vpack.c.b16 %v2030, %v2029
        %v2041 = vpack.c.b16 %v2032, %v2031
        %v2042 = vpack.c.b16 %v2034, %v2033
        %2051 = vmatprep.subr.bf16.mxu0 0
        %2052 = vmatpush1.bf16.msra.mxu0 %v2035
        %2053 = vmatprep.subr.bf16.mxu0 0
        %2054 = vmatpush1.bf16.msra.mxu0 %v2036
        %2055 = vmatprep.subr.bf16.mxu0 0
        %2056 = vmatpush1.bf16.msra.mxu0 %v2037
        %2057 = vmatprep.subr.bf16.mxu0 0
        %2058 = vmatpush1.bf16.msra.mxu0 %v2038
        %2059 = vmatprep.subr.bf16.mxu0 0
        %2060 = vmatpush1.bf16.msra.mxu0 %v2039
        %2061 = vmatprep.subr.bf16.mxu0 0
        %2062 = vmatpush1.bf16.msra.mxu0 %v2040
        %2063 = vmatprep.subr.bf16.mxu0 0
        %2064 = vmatpush1.bf16.msra.mxu0 %v2041
        %2065 = vmatprep.subr.bf16.mxu0 0
        %2066 = vmatpush1.bf16.msra.mxu0 %v2042
        %2067 = vmatprep.subr.bf16.mxu0 0
        %2068 = vmatpush1.bf16.msra.mxu0 0
        %2069 = vmatprep.subr.bf16.mxu0 0
        %2070 = vmatpush1.bf16.msra.mxu0 0
        %2071 = vmatprep.subr.bf16.mxu0 0
        %2072 = vmatpush1.bf16.msra.mxu0 0
        %2073 = vmatprep.subr.bf16.mxu0 0
        %2074 = vmatpush1.bf16.msra.mxu0 0
        %2075 = vmatprep.subr.bf16.mxu0 0
        %2076 = vmatpush1.bf16.msra.mxu0 0
        %2077 = vmatprep.subr.bf16.mxu0 0
        %2078 = vmatpush1.bf16.msra.mxu0 0
        %2079 = vmatprep.subr.bf16.mxu0 0
        %2080 = vmatpush1.bf16.msra.mxu0 0
        %2081 = vmatprep.subr.bf16.mxu0 0
        %2082 = vmatpush1.bf16.msra.mxu0 0
        %2083 = vmatprep.mubr.bf16.mxu0 0
        %2084 = vmatmul.mubr.bf16.gmra.mrb[0].mxu0 %v1986
        %v2085 = vpop.f32.mrb[0].mxu0
        %v2086 = vadd.f32 0.0, %v2085
        %v2087 = vpop.f32.mrb[0].mxu0
        %v2088 = vpop.f32.mrb[0].mxu0
        %v2089 = vadd.f32 0.0, %v2088
        %v2090 = vpop.f32.mrb[0].mxu0
        %2091 = vdwg.mxu0
        %v2092 = vadd.f32 %v1856, %v2086
        %v2093 = vadd.f32 %v1857, %v2089
        %v2094 = vld [vmem:[%s637] sm:$0x1]
        %v2096 = vlaneseq
        %v2097 = vshrl.u32 %v2096, 7
        %v2098 = vsub.s32 0, %v2097
        %v2099 = vrot.slane %v2094, %v2098
        %v2101 = vadd.f32 %v2092, %v2099
        %v2102 = vadd.f32 %v2093, %v2099
        %p2103 = scmp.lt.s32.totalorder %s30, 1
        // Predicated region
        $region77: #{tpu_custom_call.1} parent=71 // pred_check
          %p2104 = pneg %p2103
        $region78: #{tpu_custom_call.1} parent=71 // pred_check_branch
          %2106 = sbr.rel (%p2104) target = $region80
        $region79: #{tpu_custom_call.1} parent=71 // pred_region
          %2107 = vst.msk [vmem:[#allocation2] sm:$0xff] %vm653, %v2101
          %2108 = vst.msk [vmem:[#allocation2 + $0x8] sm:$0xff] %vm653, %v2102
        $region80: #{tpu_custom_call.1} parent=71 // pred_fallthru
          _
        %p2109 = scmp.eq.s32.totalorder %s30, 1
        // Predicated region
        $region81: #{tpu_custom_call.1} parent=71 // pred_check
          %p2110 = pneg %p2109
        $region82: #{tpu_custom_call.1} parent=71 // pred_check_branch
          %2112 = sbr.rel (%p2110) target = $region84
        $region83: #{tpu_custom_call.1} parent=71 // pred_region
          %2113 = vst.msk [vmem:[#allocation3] sm:$0xff] %vm653, %v2101
          %2114 = vst.msk [vmem:[#allocation3 + $0x8] sm:$0xff] %vm653, %v2102
        $region84: #{tpu_custom_call.1} parent=71 // pred_fallthru
          _
        // Predicated region
        $region85: #{tpu_custom_call.1} parent=71 // pred_check
          %p2115 = pneg %p393
        $region86: #{tpu_custom_call.1} parent=71 // pred_check_branch
          %2117 = sbr.rel (%p2115) target = $region88
        $region87: #{tpu_custom_call.1} parent=71 // pred_region
          %s2118 = smul.u32 2, %s29
          %s2120 = ssub.s32 256, 256
          %2121 = vsyncadd [#allocation4], %s2120
          %s2122 = smul.addr %s2118, 128
          %s2123 = scalar_lea.hbm %s13, %s2122
          %s2124 = sshll.u32 [#allocation3], 4
          %s2125 = int_to_ptr.vmem [resolvable:$true] %s2124
          %2130 = dma.vmem_to_hbm [thread:$0]  %s2125, 256, %s2123, [#allocation4], 128, 128, 8
        $region88: #{tpu_custom_call.1} parent=71 // pred_fallthru
          _
        // Predicated region
        $region89: #{tpu_custom_call.1} parent=71 // pred_check
          %p2131 = pneg %p393
        $region90: #{tpu_custom_call.1} parent=71 // pred_check_branch
          %2133 = sbr.rel (%p2131) target = $region92
        $region91: #{tpu_custom_call.1} parent=71 // pred_region
          %2134 = dma.done [#allocation4], 256
        $region92: #{tpu_custom_call.1} parent=71 // pred_fallthru
          _
      $region72: #{tpu_custom_call.1} parent=5 // pred_fallthru
        _
      %p2135 = scmp.le.s32.totalorder 2, %s20
      // Predicated region
      $region93: #{tpu_custom_call.1} parent=5 // pred_check
        %p2136 = pneg %p2135
      $region94: #{tpu_custom_call.1} parent=5 // pred_check_branch
        %2138 = sbr.rel (%p2136) target = $region96
      $region95: #{tpu_custom_call.1} parent=5 // pred_region
        %s2139 = ssub.s32 %s20, 2
      $region96: #{tpu_custom_call.1} parent=5 // pred_fallthru
        _
    $region6: #{tpu_custom_call.1} parent=1 // loop_footer
      %s24 = sadd.s32 1, %s20
    $region7: #{tpu_custom_call.1} parent=1 // loop_footer_branch
      %19 = sbr.rel target = $region3
    $region8: #{tpu_custom_call.1} parent=1 // loop_exit
      _
    %2140 = vsyncpa [#allocation4], 1
    %s2141 = scalar_lea.sflag [#allocation4], 1
    %2142 = vsyncpa %s2141, 1

</llo_original>
